<compile_context>
chip_gen: v5e
topology: v5e:2x2
jax: 0.10.0
libtpu: 0.0.40
codegen_flags: <defaults>
</compile_context>

<pallas_src>
import jax
import jax.numpy as jnp
from jax.experimental import pallas as pl
from jax.experimental.pallas import tpu as pltpu

MAX_TILE_B = 256   # M tile cap: multiple of 128 (v5e MXU) and 256 (v6e/v7x MXU)
K1 = 784           # logical fc1 fan-in
K1_PAD = 896       # 7 * 128  -> unmasked, full-width MXU K passes
H1 = 512
H2 = 128
OUT = 10           # logical head width
OUT_PAD = 128      # lane-dense head / output store
NEG_BIG = -1e30    # pad-column bias: exp(NEG_BIG - m) == 0.0 in f32


def mlp_kernel(x_ref, w1_ref, b1_ref, w2_ref, b2_ref, w3_ref, b3_ref, o_ref):
    # fc1 + ReLU   (bf16 operands on the MXU, f32 accumulate / epilogue)
    h1 = jnp.dot(x_ref[...], w1_ref[...], preferred_element_type=jnp.float32)
    h1 = jnp.maximum(h1 + b1_ref[...], 0.0)                 # (TILE_B, 512) f32

    # fc2 + ReLU
    h2 = jnp.dot(h1.astype(jnp.bfloat16), w2_ref[...],
                 preferred_element_type=jnp.float32)
    h2 = jnp.maximum(h2 + b2_ref[...], 0.0)                 # (TILE_B, 128) f32

    # fc3 (head padded to 128 lanes; pad-bias = NEG_BIG)
    logits = jnp.dot(h2.astype(jnp.bfloat16), w3_ref[...],
                     preferred_element_type=jnp.float32)
    logits = logits + b3_ref[...]                           # (TILE_B, 128) f32

    # log_softmax over the lane axis; padded columns contribute exactly 0 to
    # the sum and never win the max, so this equals log_softmax over the 10
    # real logits.
    m = jnp.max(logits, axis=1, keepdims=True)
    shifted = logits - m
    lse = jnp.log(jnp.sum(jnp.exp(shifted), axis=1, keepdims=True))
    o_ref[...] = shifted - lse


def prepare_params(params_f32):
    """Pad + cast raw f32 (in, out) params into the kernel layout."""
    w1, b1, w2, b2, w3, b3 = params_f32

    w1p = jnp.zeros((K1_PAD, H1), jnp.float32).at[:K1, :].set(w1)
    w3p = jnp.zeros((H2, OUT_PAD), jnp.float32).at[:, :OUT].set(w3)
    b3p = jnp.full((1, OUT_PAD), NEG_BIG, jnp.float32).at[:, :OUT].set(b3)

    return (w1p.astype(jnp.bfloat16), b1.astype(jnp.float32),
            w2.astype(jnp.bfloat16), b2.astype(jnp.float32),
            w3p.astype(jnp.bfloat16), b3p)


def _round_up(n, m):
    return ((n + m - 1) // m) * m


def net_forward(x, kernel_params):
    """x: anything that flattens to (-1, 784); returns (B, 10) f32 log-probs."""
    w1, b1, w2, b2, w3, b3 = kernel_params

    x2d = x.reshape(-1, K1)
    B = x2d.shape[0]

    # Adaptive batch tile: full 256-row MXU tile for large batches, a small
    # sublane-aligned (multiple of 8) tile for tiny batches so we don't pad a
    # batch of 8 up to 256 rows of wasted compute.
    tile_b = min(MAX_TILE_B, _round_up(B, 8))
    num_tiles = pl.cdiv(B, tile_b)
    B_pad = num_tiles * tile_b

    # Pad batch to a tile_b multiple and K to 896 (zeros -> no effect on matmul).
    xp = jnp.zeros((B_pad, K1_PAD), jnp.bfloat16)
    xp = xp.at[:B, :K1].set(x2d.astype(jnp.bfloat16))

    flops = 2 * B_pad * (K1_PAD * H1 + H1 * H2 + H2 * OUT_PAD)
    bytes_accessed = (xp.size * 2                            # bf16 input
                      + (w1.size + w2.size + w3.size) * 2    # bf16 weights
                      + (b1.size + b2.size + b3.size) * 4    # f32 biases
                      + B_pad * OUT_PAD * 4)                 # f32 output
    cost = pl.CostEstimate(flops=flops,
                           transcendentals=B_pad * OUT_PAD,
                           bytes_accessed=bytes_accessed)

    out = pl.pallas_call(
        mlp_kernel,
        out_shape=jax.ShapeDtypeStruct((B_pad, OUT_PAD), jnp.float32),
        grid=(num_tiles,),
        in_specs=[
            pl.BlockSpec((tile_b, K1_PAD), lambda i: (i, 0)),   # x tile
            pl.BlockSpec((K1_PAD, H1),     lambda i: (0, 0)),   # w1 (resident)
            pl.BlockSpec((1, H1),          lambda i: (0, 0)),   # b1
            pl.BlockSpec((H1, H2),         lambda i: (0, 0)),   # w2
            pl.BlockSpec((1, H2),          lambda i: (0, 0)),   # b2
            pl.BlockSpec((H2, OUT_PAD),    lambda i: (0, 0)),   # w3
            pl.BlockSpec((1, OUT_PAD),     lambda i: (0, 0)),   # b3
        ],
        out_specs=pl.BlockSpec((tile_b, OUT_PAD), lambda i: (i, 0)),
        compiler_params=pltpu.CompilerParams(
            dimension_semantics=("parallel",)),
        cost_estimate=cost,
    )(xp, w1, b1, w2, b2, w3, b3)

    return out[:B, :OUT]


def init_params(key):
    """PyTorch-style nn.Linear init (uniform +/- 1/sqrt(fan_in)); (in, out)."""
    def linear(k, fan_in, fan_out):
        kw, kb = jax.random.split(k)
        bound = 1.0 / jnp.sqrt(fan_in)
        w = jax.random.uniform(kw, (fan_in, fan_out), jnp.float32, -bound, bound)
        b = jax.random.uniform(kb, (1, fan_out), jnp.float32, -bound, bound)
        return w, b

    k1, k2, k3 = jax.random.split(key, 3)
    w1, b1 = linear(k1, K1, H1)
    w2, b2 = linear(k2, H1, H2)
    w3, b3 = linear(k3, H2, OUT)
    return (w1, b1, w2, b2, w3, b3)


if __name__ == "__main__":
    key = jax.random.PRNGKey(0)
    pkey, xkey = jax.random.split(key)

    params_f32 = init_params(pkey)
    kernel_params = prepare_params(params_f32)

    # Small MNIST-like batch: (B, 1, 28, 28) -> flattened to (B, 784)
    B = 8
    x = jax.random.normal(xkey, (B, 1, 28, 28), jnp.float32)

    out = net_forward(x, kernel_params)
    out = jax.block_until_ready(out)

    # Plain-JAX reference using the same bf16 weights / f32 biases (kernel runs
    # the matmuls in bf16, so the check uses matching precision).
    w1, b1, w2, b2, w3, b3 = params_f32
    xf = x.reshape(-1, K1).astype(jnp.bfloat16)
    h1 = jnp.maximum(
        jnp.dot(xf, w1.astype(jnp.bfloat16),
                preferred_element_type=jnp.float32) + b1, 0.0)
    h2 = jnp.maximum(
        jnp.dot(h1.astype(jnp.bfloat16), w2.astype(jnp.bfloat16),
                preferred_element_type=jnp.float32) + b2, 0.0)
    logits = jnp.dot(h2.astype(jnp.bfloat16), w3.astype(jnp.bfloat16),
                     preferred_element_type=jnp.float32) + b3
    ref = jax.nn.log_softmax(logits, axis=1)

    assert out.shape == (B, OUT)
    assert jnp.allclose(out, ref, atol=3e-2, rtol=3e-2)

    # Row sums of exp(log_probs) over the 10 real classes must be ~1.
    assert jnp.allclose(jnp.sum(jnp.exp(out), axis=1), 1.0, atol=1e-3)

    print("KERNEL_OK")
</pallas_src>

<mosaic_0001>
module attributes {stable_mosaic.version = 11 : i64} {
  func.func @mlp_kernel(%arg0: i32, %arg1: memref<8x896xbf16, #tpu.memory_space<vmem>>, %arg2: memref<896x512xbf16, #tpu.memory_space<vmem>>, %arg3: memref<1x512xf32, #tpu.memory_space<vmem>>, %arg4: memref<512x128xbf16, #tpu.memory_space<vmem>>, %arg5: memref<1x128xf32, #tpu.memory_space<vmem>>, %arg6: memref<128x128xbf16, #tpu.memory_space<vmem>>, %arg7: memref<1x128xf32, #tpu.memory_space<vmem>>, %arg8: memref<8x128xf32, #tpu.memory_space<vmem>>) attributes {dimension_semantics = [#tpu.dimension_semantics<parallel>], iteration_bounds = array<i64: 1>, scalar_prefetch = 0 : i64, scratch_operands = 0 : i64, tpu.core_type = #tpu.core_type<tc>, window_params = [{transform_indices = @transform_0, window_bounds = array<i64: 8, 896>}, {pipeline_mode = #tpu.pipeline_mode<synchronous>, transform_indices = @transform_1, window_bounds = array<i64: 896, 512>}, {pipeline_mode = #tpu.pipeline_mode<synchronous>, transform_indices = @transform_2, window_bounds = array<i64: 1, 512>}, {pipeline_mode = #tpu.pipeline_mode<synchronous>, transform_indices = @transform_3, window_bounds = array<i64: 512, 128>}, {pipeline_mode = #tpu.pipeline_mode<synchronous>, transform_indices = @transform_4, window_bounds = array<i64: 1, 128>}, {pipeline_mode = #tpu.pipeline_mode<synchronous>, transform_indices = @transform_5, window_bounds = array<i64: 128, 128>}, {pipeline_mode = #tpu.pipeline_mode<synchronous>, transform_indices = @transform_6, window_bounds = array<i64: 1, 128>}, {transform_indices = @transform_7, window_bounds = array<i64: 8, 128>}]} {
    %c0 = arith.constant 0 : index
    %c0_0 = arith.constant 0 : index
    %0 = vector.load %arg1[%c0, %c0_0] : memref<8x896xbf16, #tpu.memory_space<vmem>>, vector<8x896xbf16>
    %c0_1 = arith.constant 0 : index
    %c0_2 = arith.constant 0 : index
    %1 = vector.load %arg2[%c0_1, %c0_2] : memref<896x512xbf16, #tpu.memory_space<vmem>>, vector<896x512xbf16>
    %cst = arith.constant dense<0.000000e+00> : vector<8x512xf32>
    %2 = tpu.matmul %0, %1, %cst {dimension_numbers = #tpu.dot_dimension_numbers<[1], [0], [0], [1], [0, 0, 1, 1], [], []>} : vector<8x896xbf16>, vector<896x512xbf16>, vector<8x512xf32> -> vector<8x512xf32>
    %c0_3 = arith.constant 0 : index
    %c0_4 = arith.constant 0 : index
    %3 = vector.load %arg3[%c0_3, %c0_4] : memref<1x512xf32, #tpu.memory_space<vmem>>, vector<1x512xf32>
    %4 = vector.broadcast %3 : vector<1x512xf32> to vector<8x512xf32>
    %5 = arith.addf %2, %4 : vector<8x512xf32>
    %cst_5 = arith.constant 0.000000e+00 : f32
    %6 = vector.broadcast %cst_5 : f32 to vector<8x512xf32>
    %7 = arith.maximumf %5, %6 : vector<8x512xf32>
    %8 = arith.truncf %7 : vector<8x512xf32> to vector<8x512xbf16>
    %c0_6 = arith.constant 0 : index
    %c0_7 = arith.constant 0 : index
    %9 = vector.load %arg4[%c0_6, %c0_7] : memref<512x128xbf16, #tpu.memory_space<vmem>>, vector<512x128xbf16>
    %cst_8 = arith.constant dense<0.000000e+00> : vector<8x128xf32>
    %10 = tpu.matmul %8, %9, %cst_8 {dimension_numbers = #tpu.dot_dimension_numbers<[1], [0], [0], [1], [0, 0, 1, 1], [], []>} : vector<8x512xbf16>, vector<512x128xbf16>, vector<8x128xf32> -> vector<8x128xf32>
    %c0_9 = arith.constant 0 : index
    %c0_10 = arith.constant 0 : index
    %11 = vector.load %arg5[%c0_9, %c0_10] : memref<1x128xf32, #tpu.memory_space<vmem>>, vector<1x128xf32>
    %12 = vector.broadcast %11 : vector<1x128xf32> to vector<8x128xf32>
    %13 = arith.addf %10, %12 : vector<8x128xf32>
    %cst_11 = arith.constant 0.000000e+00 : f32
    %14 = vector.broadcast %cst_11 : f32 to vector<8x128xf32>
    %15 = arith.maximumf %13, %14 : vector<8x128xf32>
    %16 = arith.truncf %15 : vector<8x128xf32> to vector<8x128xbf16>
    %c0_12 = arith.constant 0 : index
    %c0_13 = arith.constant 0 : index
    %17 = vector.load %arg6[%c0_12, %c0_13] : memref<128x128xbf16, #tpu.memory_space<vmem>>, vector<128x128xbf16>
    %cst_14 = arith.constant dense<0.000000e+00> : vector<8x128xf32>
    %18 = tpu.matmul %16, %17, %cst_14 {dimension_numbers = #tpu.dot_dimension_numbers<[1], [0], [0], [1], [0, 0, 1, 1], [], []>} : vector<8x128xbf16>, vector<128x128xbf16>, vector<8x128xf32> -> vector<8x128xf32>
    %c0_15 = arith.constant 0 : index
    %c0_16 = arith.constant 0 : index
    %19 = vector.load %arg7[%c0_15, %c0_16] : memref<1x128xf32, #tpu.memory_space<vmem>>, vector<1x128xf32>
    %20 = vector.broadcast %19 : vector<1x128xf32> to vector<8x128xf32>
    %21 = arith.addf %18, %20 : vector<8x128xf32>
    %cst_17 = arith.constant dense<0xFF800000> : vector<8xf32>
    %22 = vector.multi_reduction <maximumf>, %21, %cst_17 [1] : vector<8x128xf32> to vector<8xf32>
    %23 = vector.shape_cast %22 : vector<8xf32> to vector<8x1xf32>
    %24 = vector.broadcast %23 : vector<8x1xf32> to vector<8x128xf32>
    %25 = arith.subf %21, %24 : vector<8x128xf32>
    %26 = math.exp %25 : vector<8x128xf32>
    %cst_18 = arith.constant dense<0.000000e+00> : vector<8xf32>
    %27 = vector.multi_reduction <add>, %26, %cst_18 [1] : vector<8x128xf32> to vector<8xf32>
    %28 = vector.shape_cast %27 : vector<8xf32> to vector<8x1xf32>
    %29 = math.log %28 : vector<8x1xf32>
    %30 = vector.broadcast %29 : vector<8x1xf32> to vector<8x128xf32>
    %31 = arith.subf %25, %30 : vector<8x128xf32>
    %c0_19 = arith.constant 0 : index
    %c0_20 = arith.constant 0 : index
    %32 = vector.load %arg8[%c0_19, %c0_20] : memref<8x128xf32, #tpu.memory_space<vmem>>, vector<8x128xf32>
    tpu.vector_store %arg8[%c0_19, %c0_20], %31 {strides = array<i32>} : memref<8x128xf32, #tpu.memory_space<vmem>>, vector<8x128xf32>,
    return
  }
  func.func @transform_0(%arg0: i32) -> (i32, i32) {
    %c0_i32 = arith.constant 0 : i32
    %c0_i32_0 = arith.constant 0 : i32
    return %arg0, %c0_i32 : i32, i32
  }
  func.func @transform_1(%arg0: i32) -> (i32, i32) {
    %c0_i32 = arith.constant 0 : i32
    %c0_i32_0 = arith.constant 0 : i32
    %c0_i32_1 = arith.constant 0 : i32
    return %c0_i32, %c0_i32_0 : i32, i32
  }
  func.func @transform_2(%arg0: i32) -> (i32, i32) {
    %c0_i32 = arith.constant 0 : i32
    %c0_i32_0 = arith.constant 0 : i32
    %c0_i32_1 = arith.constant 0 : i32
    return %c0_i32, %c0_i32_0 : i32, i32
  }
  func.func @transform_3(%arg0: i32) -> (i32, i32) {
    %c0_i32 = arith.constant 0 : i32
    %c0_i32_0 = arith.constant 0 : i32
    %c0_i32_1 = arith.constant 0 : i32
    return %c0_i32, %c0_i32_0 : i32, i32
  }
  func.func @transform_4(%arg0: i32) -> (i32, i32) {
    %c0_i32 = arith.constant 0 : i32
    %c0_i32_0 = arith.constant 0 : i32
    %c0_i32_1 = arith.constant 0 : i32
    return %c0_i32, %c0_i32_0 : i32, i32
  }
  func.func @transform_5(%arg0: i32) -> (i32, i32) {
    %c0_i32 = arith.constant 0 : i32
    %c0_i32_0 = arith.constant 0 : i32
    %c0_i32_1 = arith.constant 0 : i32
    return %c0_i32, %c0_i32_0 : i32, i32
  }
  func.func @transform_6(%arg0: i32) -> (i32, i32) {
    %c0_i32 = arith.constant 0 : i32
    %c0_i32_0 = arith.constant 0 : i32
    %c0_i32_1 = arith.constant 0 : i32
    return %c0_i32, %c0_i32_0 : i32, i32
  }
  func.func @transform_7(%arg0: i32) -> (i32, i32) {
    %c0_i32 = arith.constant 0 : i32
    %c0_i32_0 = arith.constant 0 : i32
    return %arg0, %c0_i32 : i32, i32
  }
}

</mosaic_0001>

<llo_original>
// kernel: tpu_custom_call.1
$region0: #{tpu_custom_call.1}
  #allocation0 [shape = 'u32[]', space=smem, size = 0x4, offset = 0x4, fixed_abs, tag = 'smem constant byte address 0x4 - core index']
  #allocation1 [shape = 'u32[72,128]{1,0:T(1,128)}', space=vmem, size = 0x9000, scoped, tag = 'internal scratch']
  %s0 = inlined_call_operand.hbm [shape: bf16[8,896], index: 0, kind: input, shape index: {}]
  %s1 = inlined_call_operand.hbm [shape: bf16[896,512], index: 1, kind: input, shape index: {}]
  %s2 = inlined_call_operand.hbm [shape: f32[1,512], index: 2, kind: input, shape index: {}]
  %s3 = inlined_call_operand.hbm [shape: bf16[512,128], index: 3, kind: input, shape index: {}]
  %s4 = inlined_call_operand.vmem [shape: f32[1,128], index: 4, kind: input, shape index: {}]
  %s5 = inlined_call_operand.hbm [shape: bf16[128,128], index: 5, kind: input, shape index: {}]
  %s6 = inlined_call_operand.vmem [shape: f32[1,128], index: 6, kind: input, shape index: {}]
  %s7 = inlined_call_operand.hbm [shape: f32[8,128], index: 7, kind: output, shape index: {}]
  %s8 = sld [smem:[#allocation0]]
  $region58: #{tpu_custom_call.1} parent=0
    _
  %s10 = ssub.s32 1, %s8
  %s11 = scalar_select 0, %s10, %s8
  $region1: #{tpu_custom_call.1} parent=0
    #allocation2 [shape = 'u8[14336]{0}', space=vmem, size = 0x3800, scoped, tag = 'input window, operand 0, single buffered']
    #allocation3 [shape = 's32[1]{0}', space=sflag, size = 0x4, scoped, tag = 'scoped memory for tpu_custom_call.1']
    #allocation4 [shape = 's32[1]{0}', space=sflag, size = 0x4, scoped, tag = 'scoped memory for tpu_custom_call.1']
    #allocation5 [shape = 'u8[917504]{0}', space=vmem, size = 0xe0000, scoped, tag = 'input window, operand 1, single buffered']
    #allocation6 [shape = 's32[1]{0}', space=sflag, size = 0x4, scoped, tag = 'scoped memory for tpu_custom_call.1']
    #allocation7 [shape = 'u8[2048]{0}', space=vmem, size = 0x800, scoped, tag = 'input window, operand 2, single buffered']
    #allocation8 [shape = 'u8[131072]{0}', space=vmem, size = 0x20000, scoped, tag = 'input window, operand 3, single buffered']
    #allocation9 [shape = 's32[1]{0}', space=sflag, size = 0x4, scoped, tag = 'scoped memory for tpu_custom_call.1']
    #allocation10 [shape = 'u8[32768]{0}', space=vmem, size = 0x8000, scoped, tag = 'input window, operand 5, single buffered']
    #allocation11 [shape = 'u8[4096]{0}', space=vmem, size = 0x1000, scoped, tag = 'output window, operand 0, single buffered']
    %12 = vsyncpa [#allocation3], 0
    %13 = vsyncpa [#allocation6], 0
    %14 = vsyncpa [#allocation9], 0
    %15 = vsyncpa [#allocation4], 0
    // Predicated region
    $region2: #{tpu_custom_call.1} parent=1 // pred_check
      _
    $region3: #{tpu_custom_call.1} parent=1 // pred_check_branch
      %17 = sbr.rel (0) target = $region5
    $region4: #{tpu_custom_call.1} parent=1 // pred_region
      %19 = vsyncadd [#allocation3], 0
      %s21 = sshll.u32 %s0, 4
      %s22 = int_to_ptr.hbm [resolvable:$true] %s21
      %s23 = sshll.u32 [#allocation2], 4
      %s24 = int_to_ptr.vmem [resolvable:$true] %s23
      %26 = dma.hbm_to_vmem [thread:$0]  %s22, 448, %s24, [#allocation3]
    $region5: #{tpu_custom_call.1} parent=1 // pred_fallthru
      _
    // Predicated region
    $region6: #{tpu_custom_call.1} parent=1 // pred_check
      _
    $region7: #{tpu_custom_call.1} parent=1 // pred_check_branch
      %28 = sbr.rel (0) target = $region9
    $region8: #{tpu_custom_call.1} parent=1 // pred_region
      %30 = vsyncadd [#allocation6], 0
      %s31 = sshll.u32 %s1, 4
      %s32 = int_to_ptr.hbm [resolvable:$true] %s31
      %s33 = sshll.u32 [#allocation5], 4
      %s34 = int_to_ptr.vmem [resolvable:$true] %s33
      %39 = dma.hbm_to_vmem [thread:$0]  %s32, 28672, %s34, [#allocation6], 256, 256, 16
    $region9: #{tpu_custom_call.1} parent=1 // pred_fallthru
      _
    // Predicated region
    $region10: #{tpu_custom_call.1} parent=1 // pred_check
      _
    $region11: #{tpu_custom_call.1} parent=1 // pred_check_branch
      %41 = sbr.rel (0) target = $region13
    $region12: #{tpu_custom_call.1} parent=1 // pred_region
      %43 = vsyncadd [#allocation6], 0
      %s45 = sshll.u32 %s2, 4
      %s46 = int_to_ptr.hbm [resolvable:$true] %s45
      %s47 = sshll.u32 [#allocation7], 4
      %s48 = int_to_ptr.vmem [resolvable:$true] %s47
      %50 = dma.hbm_to_vmem [thread:$0]  %s46, 64, %s48, [#allocation6]
    $region13: #{tpu_custom_call.1} parent=1 // pred_fallthru
      _
    // Predicated region
    $region14: #{tpu_custom_call.1} parent=1 // pred_check
      _
    $region15: #{tpu_custom_call.1} parent=1 // pred_check_branch
      %52 = sbr.rel (0) target = $region17
    $region16: #{tpu_custom_call.1} parent=1 // pred_region
      %54 = vsyncadd [#allocation9], 0
      %s55 = sshll.u32 %s3, 4
      %s56 = int_to_ptr.hbm [resolvable:$true] %s55
      %s57 = sshll.u32 [#allocation8], 4
      %s58 = int_to_ptr.vmem [resolvable:$true] %s57
      %63 = dma.hbm_to_vmem [thread:$0]  %s56, 4096, %s58, [#allocation9], 64, 64, 4
    $region17: #{tpu_custom_call.1} parent=1 // pred_fallthru
      _
    // Predicated region
    $region18: #{tpu_custom_call.1} parent=1 // pred_check
      _
    $region19: #{tpu_custom_call.1} parent=1 // pred_check_branch
      %65 = sbr.rel (0) target = $region21
    $region20: #{tpu_custom_call.1} parent=1 // pred_region
      _
    $region21: #{tpu_custom_call.1} parent=1 // pred_fallthru
      _
    // Predicated region
    $region22: #{tpu_custom_call.1} parent=1 // pred_check
      _
    $region23: #{tpu_custom_call.1} parent=1 // pred_check_branch
      %67 = sbr.rel (0) target = $region25
    $region24: #{tpu_custom_call.1} parent=1 // pred_region
      %69 = vsyncadd [#allocation9], 0
      %s70 = sshll.u32 %s5, 4
      %s71 = int_to_ptr.hbm [resolvable:$true] %s70
      %s72 = sshll.u32 [#allocation10], 4
      %s73 = int_to_ptr.vmem [resolvable:$true] %s72
      %78 = dma.hbm_to_vmem [thread:$0]  %s71, 1024, %s73, [#allocation9], 64, 64, 4
    $region25: #{tpu_custom_call.1} parent=1 // pred_fallthru
      _
    // Predicated region
    $region26: #{tpu_custom_call.1} parent=1 // pred_check
      _
    $region27: #{tpu_custom_call.1} parent=1 // pred_check_branch
      %80 = sbr.rel (0) target = $region29
    $region28: #{tpu_custom_call.1} parent=1 // pred_region
      _
    $region29: #{tpu_custom_call.1} parent=1 // pred_fallthru
      _
    // Predicated region
    $region30: #{tpu_custom_call.1} parent=1 // pred_check
      _
    $region31: #{tpu_custom_call.1} parent=1 // pred_check_branch
      %82 = sbr.rel (0) target = $region33
    $region32: #{tpu_custom_call.1} parent=1 // pred_region
      %84 = dma.done [#allocation3], 448
    $region33: #{tpu_custom_call.1} parent=1 // pred_fallthru
      _
    // Predicated region
    $region34: #{tpu_custom_call.1} parent=1 // pred_check
      _
    $region35: #{tpu_custom_call.1} parent=1 // pred_check_branch
      %86 = sbr.rel (0) target = $region37
    $region36: #{tpu_custom_call.1} parent=1 // pred_region
      %88 = dma.done [#allocation6], 28672
    $region37: #{tpu_custom_call.1} parent=1 // pred_fallthru
      _
    // Predicated region
    $region38: #{tpu_custom_call.1} parent=1 // pred_check
      _
    $region39: #{tpu_custom_call.1} parent=1 // pred_check_branch
      %90 = sbr.rel (0) target = $region41
    $region40: #{tpu_custom_call.1} parent=1 // pred_region
      %92 = dma.done [#allocation6], 64
    $region41: #{tpu_custom_call.1} parent=1 // pred_fallthru
      _
    // Predicated region
    $region42: #{tpu_custom_call.1} parent=1 // pred_check
      _
    $region43: #{tpu_custom_call.1} parent=1 // pred_check_branch
      %94 = sbr.rel (0) target = $region45
    $region44: #{tpu_custom_call.1} parent=1 // pred_region
      %96 = dma.done [#allocation9], 4096
    $region45: #{tpu_custom_call.1} parent=1 // pred_fallthru
      _
    // Predicated region
    $region46: #{tpu_custom_call.1} parent=1 // pred_check
      _
    $region47: #{tpu_custom_call.1} parent=1 // pred_check_branch
      %98 = sbr.rel (0) target = $region49
    $region48: #{tpu_custom_call.1} parent=1 // pred_region
      %100 = dma.done [#allocation9], 1024
    $region49: #{tpu_custom_call.1} parent=1 // pred_fallthru
      _
    %v101 = vld [vmem:[#allocation2] sm:$0xff]
    %v102 = vld [vmem:[#allocation2 + $0x8] sm:$0xff]
    %v103 = vld [vmem:[#allocation2 + $0x10] sm:$0xff]
    %v104 = vld [vmem:[#allocation2 + $0x18] sm:$0xf]
    %v105 = vld [vmem:[#allocation5] sm:$0xff]
    %v106 = vld [vmem:[#allocation5 + $0x8] sm:$0xff]
    %v107 = vld [vmem:[#allocation5 + $0x10] sm:$0xff]
    %v108 = vld [vmem:[#allocation5 + $0x18] sm:$0xff]
    %v109 = vld [vmem:[#allocation5 + $0x20] sm:$0xff]
    %v110 = vld [vmem:[#allocation5 + $0x28] sm:$0xff]
    %v111 = vld [vmem:[#allocation5 + $0x30] sm:$0xff]
    %v112 = vld [vmem:[#allocation5 + $0x38] sm:$0xff]
    %v113 = vld [vmem:[#allocation5 + $0x40] sm:$0xff]
    %v114 = vld [vmem:[#allocation5 + $0x48] sm:$0xff]
    %v115 = vld [vmem:[#allocation5 + $0x50] sm:$0xff]
    %v116 = vld [vmem:[#allocation5 + $0x58] sm:$0xff]
    %v117 = vld [vmem:[#allocation5 + $0x60] sm:$0xff]
    %v118 = vld [vmem:[#allocation5 + $0x68] sm:$0xff]
    %v119 = vld [vmem:[#allocation5 + $0x70] sm:$0xff]
    %v120 = vld [vmem:[#allocation5 + $0x78] sm:$0xff]
    %v121 = vld [vmem:[#allocation5 + $0x80] sm:$0xff]
    %v122 = vld [vmem:[#allocation5 + $0x88] sm:$0xff]
    %v123 = vld [vmem:[#allocation5 + $0x90] sm:$0xff]
    %v124 = vld [vmem:[#allocation5 + $0x98] sm:$0xff]
    %v125 = vld [vmem:[#allocation5 + $0xa0] sm:$0xff]
    %v126 = vld [vmem:[#allocation5 + $0xa8] sm:$0xff]
    %v127 = vld [vmem:[#allocation5 + $0xb0] sm:$0xff]
    %v128 = vld [vmem:[#allocation5 + $0xb8] sm:$0xff]
    %v129 = vld [vmem:[#allocation5 + $0xc0] sm:$0xff]
    %v130 = vld [vmem:[#allocation5 + $0xc8] sm:$0xff]
    %v131 = vld [vmem:[#allocation5 + $0xd0] sm:$0xff]
    %v132 = vld [vmem:[#allocation5 + $0xd8] sm:$0xff]
    %v133 = vld [vmem:[#allocation5 + $0xe0] sm:$0xff]
    %v134 = vld [vmem:[#allocation5 + $0xe8] sm:$0xff]
    %v135 = vld [vmem:[#allocation5 + $0xf0] sm:$0xff]
    %v136 = vld [vmem:[#allocation5 + $0xf8] sm:$0xff]
    %v137 = vld [vmem:[#allocation5 + $0x100] sm:$0xff]
    %v138 = vld [vmem:[#allocation5 + $0x108] sm:$0xff]
    %v139 = vld [vmem:[#allocation5 + $0x110] sm:$0xff]
    %v140 = vld [vmem:[#allocation5 + $0x118] sm:$0xff]
    %v141 = vld [vmem:[#allocation5 + $0x120] sm:$0xff]
    %v142 = vld [vmem:[#allocation5 + $0x128] sm:$0xff]
    %v143 = vld [vmem:[#allocation5 + $0x130] sm:$0xff]
    %v144 = vld [vmem:[#allocation5 + $0x138] sm:$0xff]
    %v145 = vld [vmem:[#allocation5 + $0x140] sm:$0xff]
    %v146 = vld [vmem:[#allocation5 + $0x148] sm:$0xff]
    %v147 = vld [vmem:[#allocation5 + $0x150] sm:$0xff]
    %v148 = vld [vmem:[#allocation5 + $0x158] sm:$0xff]
    %v149 = vld [vmem:[#allocation5 + $0x160] sm:$0xff]
    %v150 = vld [vmem:[#allocation5 + $0x168] sm:$0xff]
    %v151 = vld [vmem:[#allocation5 + $0x170] sm:$0xff]
    %v152 = vld [vmem:[#allocation5 + $0x178] sm:$0xff]
    %v153 = vld [vmem:[#allocation5 + $0x180] sm:$0xff]
    %v154 = vld [vmem:[#allocation5 + $0x188] sm:$0xff]
    %v155 = vld [vmem:[#allocation5 + $0x190] sm:$0xff]
    %v156 = vld [vmem:[#allocation5 + $0x198] sm:$0xff]
    %v157 = vld [vmem:[#allocation5 + $0x1a0] sm:$0xff]
    %v158 = vld [vmem:[#allocation5 + $0x1a8] sm:$0xff]
    %v159 = vld [vmem:[#allocation5 + $0x1b0] sm:$0xff]
    %v160 = vld [vmem:[#allocation5 + $0x1b8] sm:$0xff]
    %v161 = vld [vmem:[#allocation5 + $0x1c0] sm:$0xff]
    %v162 = vld [vmem:[#allocation5 + $0x1c8] sm:$0xff]
    %v163 = vld [vmem:[#allocation5 + $0x1d0] sm:$0xff]
    %v164 = vld [vmem:[#allocation5 + $0x1d8] sm:$0xff]
    %v165 = vld [vmem:[#allocation5 + $0x1e0] sm:$0xff]
    %v166 = vld [vmem:[#allocation5 + $0x1e8] sm:$0xff]
    %v167 = vld [vmem:[#allocation5 + $0x1f0] sm:$0xff]
    %v168 = vld [vmem:[#allocation5 + $0x1f8] sm:$0xff]
    %v169 = vld [vmem:[#allocation5 + $0x200] sm:$0xff]
    %v170 = vld [vmem:[#allocation5 + $0x208] sm:$0xff]
    %v171 = vld [vmem:[#allocation5 + $0x210] sm:$0xff]
    %v172 = vld [vmem:[#allocation5 + $0x218] sm:$0xff]
    %v173 = vld [vmem:[#allocation5 + $0x220] sm:$0xff]
    %v174 = vld [vmem:[#allocation5 + $0x228] sm:$0xff]
    %v175 = vld [vmem:[#allocation5 + $0x230] sm:$0xff]
    %v176 = vld [vmem:[#allocation5 + $0x238] sm:$0xff]
    %v177 = vld [vmem:[#allocation5 + $0x240] sm:$0xff]
    %v178 = vld [vmem:[#allocation5 + $0x248] sm:$0xff]
    %v179 = vld [vmem:[#allocation5 + $0x250] sm:$0xff]
    %v180 = vld [vmem:[#allocation5 + $0x258] sm:$0xff]
    %v181 = vld [vmem:[#allocation5 + $0x260] sm:$0xff]
    %v182 = vld [vmem:[#allocation5 + $0x268] sm:$0xff]
    %v183 = vld [vmem:[#allocation5 + $0x270] sm:$0xff]
    %v184 = vld [vmem:[#allocation5 + $0x278] sm:$0xff]
    %v185 = vld [vmem:[#allocation5 + $0x280] sm:$0xff]
    %v186 = vld [vmem:[#allocation5 + $0x288] sm:$0xff]
    %v187 = vld [vmem:[#allocation5 + $0x290] sm:$0xff]
    %v188 = vld [vmem:[#allocation5 + $0x298] sm:$0xff]
    %v189 = vld [vmem:[#allocation5 + $0x2a0] sm:$0xff]
    %v190 = vld [vmem:[#allocation5 + $0x2a8] sm:$0xff]
    %v191 = vld [vmem:[#allocation5 + $0x2b0] sm:$0xff]
    %v192 = vld [vmem:[#allocation5 + $0x2b8] sm:$0xff]
    %v193 = vld [vmem:[#allocation5 + $0x2c0] sm:$0xff]
    %v194 = vld [vmem:[#allocation5 + $0x2c8] sm:$0xff]
    %v195 = vld [vmem:[#allocation5 + $0x2d0] sm:$0xff]
    %v196 = vld [vmem:[#allocation5 + $0x2d8] sm:$0xff]
    %v197 = vld [vmem:[#allocation5 + $0x2e0] sm:$0xff]
    %v198 = vld [vmem:[#allocation5 + $0x2e8] sm:$0xff]
    %v199 = vld [vmem:[#allocation5 + $0x2f0] sm:$0xff]
    %v200 = vld [vmem:[#allocation5 + $0x2f8] sm:$0xff]
    %v201 = vld [vmem:[#allocation5 + $0x300] sm:$0xff]
    %v202 = vld [vmem:[#allocation5 + $0x308] sm:$0xff]
    %v203 = vld [vmem:[#allocation5 + $0x310] sm:$0xff]
    %v204 = vld [vmem:[#allocation5 + $0x318] sm:$0xff]
    %v205 = vld [vmem:[#allocation5 + $0x320] sm:$0xff]
    %v206 = vld [vmem:[#allocation5 + $0x328] sm:$0xff]
    %v207 = vld [vmem:[#allocation5 + $0x330] sm:$0xff]
    %v208 = vld [vmem:[#allocation5 + $0x338] sm:$0xff]
    %v209 = vld [vmem:[#allocation5 + $0x340] sm:$0xff]
    %v210 = vld [vmem:[#allocation5 + $0x348] sm:$0xff]
    %v211 = vld [vmem:[#allocation5 + $0x350] sm:$0xff]
    %v212 = vld [vmem:[#allocation5 + $0x358] sm:$0xff]
    %v213 = vld [vmem:[#allocation5 + $0x360] sm:$0xff]
    %v214 = vld [vmem:[#allocation5 + $0x368] sm:$0xff]
    %v215 = vld [vmem:[#allocation5 + $0x370] sm:$0xff]
    %v216 = vld [vmem:[#allocation5 + $0x378] sm:$0xff]
    %v217 = vld [vmem:[#allocation5 + $0x380] sm:$0xff]
    %v218 = vld [vmem:[#allocation5 + $0x388] sm:$0xff]
    %v219 = vld [vmem:[#allocation5 + $0x390] sm:$0xff]
    %v220 = vld [vmem:[#allocation5 + $0x398] sm:$0xff]
    %v221 = vld [vmem:[#allocation5 + $0x3a0] sm:$0xff]
    %v222 = vld [vmem:[#allocation5 + $0x3a8] sm:$0xff]
    %v223 = vld [vmem:[#allocation5 + $0x3b0] sm:$0xff]
    %v224 = vld [vmem:[#allocation5 + $0x3b8] sm:$0xff]
    %v225 = vld [vmem:[#allocation5 + $0x3c0] sm:$0xff]
    %v226 = vld [vmem:[#allocation5 + $0x3c8] sm:$0xff]
    %v227 = vld [vmem:[#allocation5 + $0x3d0] sm:$0xff]
    %v228 = vld [vmem:[#allocation5 + $0x3d8] sm:$0xff]
    %v229 = vld [vmem:[#allocation5 + $0x3e0] sm:$0xff]
    %v230 = vld [vmem:[#allocation5 + $0x3e8] sm:$0xff]
    %v231 = vld [vmem:[#allocation5 + $0x3f0] sm:$0xff]
    %v232 = vld [vmem:[#allocation5 + $0x3f8] sm:$0xff]
    %v233 = vld [vmem:[#allocation5 + $0x400] sm:$0xff]
    %v234 = vld [vmem:[#allocation5 + $0x408] sm:$0xff]
    %v235 = vld [vmem:[#allocation5 + $0x410] sm:$0xff]
    %v236 = vld [vmem:[#allocation5 + $0x418] sm:$0xff]
    %v237 = vld [vmem:[#allocation5 + $0x420] sm:$0xff]
    %v238 = vld [vmem:[#allocation5 + $0x428] sm:$0xff]
    %v239 = vld [vmem:[#allocation5 + $0x430] sm:$0xff]
    %v240 = vld [vmem:[#allocation5 + $0x438] sm:$0xff]
    %v241 = vld [vmem:[#allocation5 + $0x440] sm:$0xff]
    %v242 = vld [vmem:[#allocation5 + $0x448] sm:$0xff]
    %v243 = vld [vmem:[#allocation5 + $0x450] sm:$0xff]
    %v244 = vld [vmem:[#allocation5 + $0x458] sm:$0xff]
    %v245 = vld [vmem:[#allocation5 + $0x460] sm:$0xff]
    %v246 = vld [vmem:[#allocation5 + $0x468] sm:$0xff]
    %v247 = vld [vmem:[#allocation5 + $0x470] sm:$0xff]
    %v248 = vld [vmem:[#allocation5 + $0x478] sm:$0xff]
    %v249 = vld [vmem:[#allocation5 + $0x480] sm:$0xff]
    %v250 = vld [vmem:[#allocation5 + $0x488] sm:$0xff]
    %v251 = vld [vmem:[#allocation5 + $0x490] sm:$0xff]
    %v252 = vld [vmem:[#allocation5 + $0x498] sm:$0xff]
    %v253 = vld [vmem:[#allocation5 + $0x4a0] sm:$0xff]
    %v254 = vld [vmem:[#allocation5 + $0x4a8] sm:$0xff]
    %v255 = vld [vmem:[#allocation5 + $0x4b0] sm:$0xff]
    %v256 = vld [vmem:[#allocation5 + $0x4b8] sm:$0xff]
    %v257 = vld [vmem:[#allocation5 + $0x4c0] sm:$0xff]
    %v258 = vld [vmem:[#allocation5 + $0x4c8] sm:$0xff]
    %v259 = vld [vmem:[#allocation5 + $0x4d0] sm:$0xff]
    %v260 = vld [vmem:[#allocation5 + $0x4d8] sm:$0xff]
    %v261 = vld [vmem:[#allocation5 + $0x4e0] sm:$0xff]
    %v262 = vld [vmem:[#allocation5 + $0x4e8] sm:$0xff]
    %v263 = vld [vmem:[#allocation5 + $0x4f0] sm:$0xff]
    %v264 = vld [vmem:[#allocation5 + $0x4f8] sm:$0xff]
    %v265 = vld [vmem:[#allocation5 + $0x500] sm:$0xff]
    %v266 = vld [vmem:[#allocation5 + $0x508] sm:$0xff]
    %v267 = vld [vmem:[#allocation5 + $0x510] sm:$0xff]
    %v268 = vld [vmem:[#allocation5 + $0x518] sm:$0xff]
    %v269 = vld [vmem:[#allocation5 + $0x520] sm:$0xff]
    %v270 = vld [vmem:[#allocation5 + $0x528] sm:$0xff]
    %v271 = vld [vmem:[#allocation5 + $0x530] sm:$0xff]
    %v272 = vld [vmem:[#allocation5 + $0x538] sm:$0xff]
    %v273 = vld [vmem:[#allocation5 + $0x540] sm:$0xff]
    %v274 = vld [vmem:[#allocation5 + $0x548] sm:$0xff]
    %v275 = vld [vmem:[#allocation5 + $0x550] sm:$0xff]
    %v276 = vld [vmem:[#allocation5 + $0x558] sm:$0xff]
    %v277 = vld [vmem:[#allocation5 + $0x560] sm:$0xff]
    %v278 = vld [vmem:[#allocation5 + $0x568] sm:$0xff]
    %v279 = vld [vmem:[#allocation5 + $0x570] sm:$0xff]
    %v280 = vld [vmem:[#allocation5 + $0x578] sm:$0xff]
    %v281 = vld [vmem:[#allocation5 + $0x580] sm:$0xff]
    %v282 = vld [vmem:[#allocation5 + $0x588] sm:$0xff]
    %v283 = vld [vmem:[#allocation5 + $0x590] sm:$0xff]
    %v284 = vld [vmem:[#allocation5 + $0x598] sm:$0xff]
    %v285 = vld [vmem:[#allocation5 + $0x5a0] sm:$0xff]
    %v286 = vld [vmem:[#allocation5 + $0x5a8] sm:$0xff]
    %v287 = vld [vmem:[#allocation5 + $0x5b0] sm:$0xff]
    %v288 = vld [vmem:[#allocation5 + $0x5b8] sm:$0xff]
    %v289 = vld [vmem:[#allocation5 + $0x5c0] sm:$0xff]
    %v290 = vld [vmem:[#allocation5 + $0x5c8] sm:$0xff]
    %v291 = vld [vmem:[#allocation5 + $0x5d0] sm:$0xff]
    %v292 = vld [vmem:[#allocation5 + $0x5d8] sm:$0xff]
    %v293 = vld [vmem:[#allocation5 + $0x5e0] sm:$0xff]
    %v294 = vld [vmem:[#allocation5 + $0x5e8] sm:$0xff]
    %v295 = vld [vmem:[#allocation5 + $0x5f0] sm:$0xff]
    %v296 = vld [vmem:[#allocation5 + $0x5f8] sm:$0xff]
    %v297 = vld [vmem:[#allocation5 + $0x600] sm:$0xff]
    %v298 = vld [vmem:[#allocation5 + $0x608] sm:$0xff]
    %v299 = vld [vmem:[#allocation5 + $0x610] sm:$0xff]
    %v300 = vld [vmem:[#allocation5 + $0x618] sm:$0xff]
    %v301 = vld [vmem:[#allocation5 + $0x620] sm:$0xff]
    %v302 = vld [vmem:[#allocation5 + $0x628] sm:$0xff]
    %v303 = vld [vmem:[#allocation5 + $0x630] sm:$0xff]
    %v304 = vld [vmem:[#allocation5 + $0x638] sm:$0xff]
    %v305 = vld [vmem:[#allocation5 + $0x640] sm:$0xff]
    %v306 = vld [vmem:[#allocation5 + $0x648] sm:$0xff]
    %v307 = vld [vmem:[#allocation5 + $0x650] sm:$0xff]
    %v308 = vld [vmem:[#allocation5 + $0x658] sm:$0xff]
    %v309 = vld [vmem:[#allocation5 + $0x660] sm:$0xff]
    %v310 = vld [vmem:[#allocation5 + $0x668] sm:$0xff]
    %v311 = vld [vmem:[#allocation5 + $0x670] sm:$0xff]
    %v312 = vld [vmem:[#allocation5 + $0x678] sm:$0xff]
    %v313 = vld [vmem:[#allocation5 + $0x680] sm:$0xff]
    %v314 = vld [vmem:[#allocation5 + $0x688] sm:$0xff]
    %v315 = vld [vmem:[#allocation5 + $0x690] sm:$0xff]
    %v316 = vld [vmem:[#allocation5 + $0x698] sm:$0xff]
    %v317 = vld [vmem:[#allocation5 + $0x6a0] sm:$0xff]
    %v318 = vld [vmem:[#allocation5 + $0x6a8] sm:$0xff]
    %v319 = vld [vmem:[#allocation5 + $0x6b0] sm:$0xff]
    %v320 = vld [vmem:[#allocation5 + $0x6b8] sm:$0xff]
    %v321 = vld [vmem:[#allocation5 + $0x6c0] sm:$0xff]
    %v322 = vld [vmem:[#allocation5 + $0x6c8] sm:$0xff]
    %v323 = vld [vmem:[#allocation5 + $0x6d0] sm:$0xff]
    %v324 = vld [vmem:[#allocation5 + $0x6d8] sm:$0xff]
    %v325 = vld [vmem:[#allocation5 + $0x6e0] sm:$0xff]
    %v326 = vld [vmem:[#allocation5 + $0x6e8] sm:$0xff]
    %v327 = vld [vmem:[#allocation5 + $0x6f0] sm:$0xff]
    %v328 = vld [vmem:[#allocation5 + $0x6f8] sm:$0xff]
    %v329 = vld [vmem:[#allocation7] sm:$0xf]
    %v331 = vperm.slane %v329, 0
    %v332 = vperm.slane %v329, 1
    %v333 = vperm.slane %v329, 2
    %v334 = vperm.slane %v329, 3
    %v343 = vunpack.c.l.b16 %v101
    %v344 = vunpack.c.h.b16 %v101
    %v345 = vunpack.c.l.b16 %v102
    %v346 = vunpack.c.h.b16 %v102
    %v347 = vunpack.c.l.b16 %v103
    %v348 = vunpack.c.h.b16 %v103
    %v349 = vunpack.c.l.b16 %v104
    %v350 = vpack.c.b16 %v343, %v343
    %v351 = vpack.c.b16 %v344, %v344
    %v352 = vpack.c.b16 %v345, %v345
    %v353 = vpack.c.b16 %v346, %v346
    %v354 = vpack.c.b16 %v347, %v347
    %v355 = vpack.c.b16 %v348, %v348
    %v356 = vpack.c.b16 %v349, %v349
    %v588 = vunpack.c.l.b16 %v105
    %v589 = vunpack.c.h.b16 %v105
    %v590 = vunpack.c.l.b16 %v106
    %v591 = vunpack.c.h.b16 %v106
    %v592 = vunpack.c.l.b16 %v107
    %v593 = vunpack.c.h.b16 %v107
    %v594 = vunpack.c.l.b16 %v108
    %v595 = vunpack.c.h.b16 %v108
    %v596 = vunpack.c.l.b16 %v109
    %v597 = vunpack.c.h.b16 %v109
    %v598 = vunpack.c.l.b16 %v110
    %v599 = vunpack.c.h.b16 %v110
    %v600 = vunpack.c.l.b16 %v111
    %v601 = vunpack.c.h.b16 %v111
    %v602 = vunpack.c.l.b16 %v112
    %v603 = vunpack.c.h.b16 %v112
    %v604 = vunpack.c.l.b16 %v113
    %v605 = vunpack.c.h.b16 %v113
    %v606 = vunpack.c.l.b16 %v114
    %v607 = vunpack.c.h.b16 %v114
    %v608 = vunpack.c.l.b16 %v115
    %v609 = vunpack.c.h.b16 %v115
    %v610 = vunpack.c.l.b16 %v116
    %v611 = vunpack.c.h.b16 %v116
    %v612 = vunpack.c.l.b16 %v117
    %v613 = vunpack.c.h.b16 %v117
    %v614 = vunpack.c.l.b16 %v118
    %v615 = vunpack.c.h.b16 %v118
    %v616 = vunpack.c.l.b16 %v119
    %v617 = vunpack.c.h.b16 %v119
    %v618 = vunpack.c.l.b16 %v120
    %v619 = vunpack.c.h.b16 %v120
    %v620 = vunpack.c.l.b16 %v121
    %v621 = vunpack.c.h.b16 %v121
    %v622 = vunpack.c.l.b16 %v122
    %v623 = vunpack.c.h.b16 %v122
    %v624 = vunpack.c.l.b16 %v123
    %v625 = vunpack.c.h.b16 %v123
    %v626 = vunpack.c.l.b16 %v124
    %v627 = vunpack.c.h.b16 %v124
    %v628 = vunpack.c.l.b16 %v125
    %v629 = vunpack.c.h.b16 %v125
    %v630 = vunpack.c.l.b16 %v126
    %v631 = vunpack.c.h.b16 %v126
    %v632 = vunpack.c.l.b16 %v127
    %v633 = vunpack.c.h.b16 %v127
    %v634 = vunpack.c.l.b16 %v128
    %v635 = vunpack.c.h.b16 %v128
    %v636 = vunpack.c.l.b16 %v129
    %v637 = vunpack.c.h.b16 %v129
    %v638 = vunpack.c.l.b16 %v130
    %v639 = vunpack.c.h.b16 %v130
    %v640 = vunpack.c.l.b16 %v131
    %v641 = vunpack.c.h.b16 %v131
    %v642 = vunpack.c.l.b16 %v132
    %v643 = vunpack.c.h.b16 %v132
    %v644 = vunpack.c.l.b16 %v133
    %v645 = vunpack.c.h.b16 %v133
    %v646 = vunpack.c.l.b16 %v134
    %v647 = vunpack.c.h.b16 %v134
    %v648 = vunpack.c.l.b16 %v135
    %v649 = vunpack.c.h.b16 %v135
    %v650 = vunpack.c.l.b16 %v136
    %v651 = vunpack.c.h.b16 %v136
    %v652 = vunpack.c.l.b16 %v137
    %v653 = vunpack.c.h.b16 %v137
    %v654 = vunpack.c.l.b16 %v138
    %v655 = vunpack.c.h.b16 %v138
    %v656 = vunpack.c.l.b16 %v139
    %v657 = vunpack.c.h.b16 %v139
    %v658 = vunpack.c.l.b16 %v140
    %v659 = vunpack.c.h.b16 %v140
    %v660 = vunpack.c.l.b16 %v141
    %v661 = vunpack.c.h.b16 %v141
    %v662 = vunpack.c.l.b16 %v142
    %v663 = vunpack.c.h.b16 %v142
    %v664 = vunpack.c.l.b16 %v143
    %v665 = vunpack.c.h.b16 %v143
    %v666 = vunpack.c.l.b16 %v144
    %v667 = vunpack.c.h.b16 %v144
    %v668 = vunpack.c.l.b16 %v145
    %v669 = vunpack.c.h.b16 %v145
    %v670 = vunpack.c.l.b16 %v146
    %v671 = vunpack.c.h.b16 %v146
    %v672 = vunpack.c.l.b16 %v147
    %v673 = vunpack.c.h.b16 %v147
    %v674 = vunpack.c.l.b16 %v148
    %v675 = vunpack.c.h.b16 %v148
    %v676 = vunpack.c.l.b16 %v149
    %v677 = vunpack.c.h.b16 %v149
    %v678 = vunpack.c.l.b16 %v150
    %v679 = vunpack.c.h.b16 %v150
    %v680 = vunpack.c.l.b16 %v151
    %v681 = vunpack.c.h.b16 %v151
    %v682 = vunpack.c.l.b16 %v152
    %v683 = vunpack.c.h.b16 %v152
    %v684 = vunpack.c.l.b16 %v153
    %v685 = vunpack.c.h.b16 %v153
    %v686 = vunpack.c.l.b16 %v154
    %v687 = vunpack.c.h.b16 %v154
    %v688 = vunpack.c.l.b16 %v155
    %v689 = vunpack.c.h.b16 %v155
    %v690 = vunpack.c.l.b16 %v156
    %v691 = vunpack.c.h.b16 %v156
    %v692 = vunpack.c.l.b16 %v157
    %v693 = vunpack.c.h.b16 %v157
    %v694 = vunpack.c.l.b16 %v158
    %v695 = vunpack.c.h.b16 %v158
    %v696 = vunpack.c.l.b16 %v159
    %v697 = vunpack.c.h.b16 %v159
    %v698 = vunpack.c.l.b16 %v160
    %v699 = vunpack.c.h.b16 %v160
    %v700 = vunpack.c.l.b16 %v161
    %v701 = vunpack.c.h.b16 %v161
    %v702 = vunpack.c.l.b16 %v162
    %v703 = vunpack.c.h.b16 %v162
    %v704 = vunpack.c.l.b16 %v163
    %v705 = vunpack.c.h.b16 %v163
    %v706 = vunpack.c.l.b16 %v164
    %v707 = vunpack.c.h.b16 %v164
    %v708 = vunpack.c.l.b16 %v165
    %v709 = vunpack.c.h.b16 %v165
    %v710 = vunpack.c.l.b16 %v166
    %v711 = vunpack.c.h.b16 %v166
    %v712 = vunpack.c.l.b16 %v167
    %v713 = vunpack.c.h.b16 %v167
    %v714 = vunpack.c.l.b16 %v168
    %v715 = vunpack.c.h.b16 %v168
    %v716 = vunpack.c.l.b16 %v169
    %v717 = vunpack.c.h.b16 %v169
    %v718 = vunpack.c.l.b16 %v170
    %v719 = vunpack.c.h.b16 %v170
    %v720 = vunpack.c.l.b16 %v171
    %v721 = vunpack.c.h.b16 %v171
    %v722 = vunpack.c.l.b16 %v172
    %v723 = vunpack.c.h.b16 %v172
    %v724 = vunpack.c.l.b16 %v173
    %v725 = vunpack.c.h.b16 %v173
    %v726 = vunpack.c.l.b16 %v174
    %v727 = vunpack.c.h.b16 %v174
    %v728 = vunpack.c.l.b16 %v175
    %v729 = vunpack.c.h.b16 %v175
    %v730 = vunpack.c.l.b16 %v176
    %v731 = vunpack.c.h.b16 %v176
    %v732 = vunpack.c.l.b16 %v177
    %v733 = vunpack.c.h.b16 %v177
    %v734 = vunpack.c.l.b16 %v178
    %v735 = vunpack.c.h.b16 %v178
    %v736 = vunpack.c.l.b16 %v179
    %v737 = vunpack.c.h.b16 %v179
    %v738 = vunpack.c.l.b16 %v180
    %v739 = vunpack.c.h.b16 %v180
    %v740 = vunpack.c.l.b16 %v181
    %v741 = vunpack.c.h.b16 %v181
    %v742 = vunpack.c.l.b16 %v182
    %v743 = vunpack.c.h.b16 %v182
    %v744 = vunpack.c.l.b16 %v183
    %v745 = vunpack.c.h.b16 %v183
    %v746 = vunpack.c.l.b16 %v184
    %v747 = vunpack.c.h.b16 %v184
    %v748 = vunpack.c.l.b16 %v185
    %v749 = vunpack.c.h.b16 %v185
    %v750 = vunpack.c.l.b16 %v186
    %v751 = vunpack.c.h.b16 %v186
    %v752 = vunpack.c.l.b16 %v187
    %v753 = vunpack.c.h.b16 %v187
    %v754 = vunpack.c.l.b16 %v188
    %v755 = vunpack.c.h.b16 %v188
    %v756 = vunpack.c.l.b16 %v189
    %v757 = vunpack.c.h.b16 %v189
    %v758 = vunpack.c.l.b16 %v190
    %v759 = vunpack.c.h.b16 %v190
    %v760 = vunpack.c.l.b16 %v191
    %v761 = vunpack.c.h.b16 %v191
    %v762 = vunpack.c.l.b16 %v192
    %v763 = vunpack.c.h.b16 %v192
    %v764 = vunpack.c.l.b16 %v193
    %v765 = vunpack.c.h.b16 %v193
    %v766 = vunpack.c.l.b16 %v194
    %v767 = vunpack.c.h.b16 %v194
    %v768 = vunpack.c.l.b16 %v195
    %v769 = vunpack.c.h.b16 %v195
    %v770 = vunpack.c.l.b16 %v196
    %v771 = vunpack.c.h.b16 %v196
    %v772 = vunpack.c.l.b16 %v197
    %v773 = vunpack.c.h.b16 %v197
    %v774 = vunpack.c.l.b16 %v198
    %v775 = vunpack.c.h.b16 %v198
    %v776 = vunpack.c.l.b16 %v199
    %v777 = vunpack.c.h.b16 %v199
    %v778 = vunpack.c.l.b16 %v200
    %v779 = vunpack.c.h.b16 %v200
    %v780 = vunpack.c.l.b16 %v201
    %v781 = vunpack.c.h.b16 %v201
    %v782 = vunpack.c.l.b16 %v202
    %v783 = vunpack.c.h.b16 %v202
    %v784 = vunpack.c.l.b16 %v203
    %v785 = vunpack.c.h.b16 %v203
    %v786 = vunpack.c.l.b16 %v204
    %v787 = vunpack.c.h.b16 %v204
    %v788 = vunpack.c.l.b16 %v205
    %v789 = vunpack.c.h.b16 %v205
    %v790 = vunpack.c.l.b16 %v206
    %v791 = vunpack.c.h.b16 %v206
    %v792 = vunpack.c.l.b16 %v207
    %v793 = vunpack.c.h.b16 %v207
    %v794 = vunpack.c.l.b16 %v208
    %v795 = vunpack.c.h.b16 %v208
    %v796 = vunpack.c.l.b16 %v209
    %v797 = vunpack.c.h.b16 %v209
    %v798 = vunpack.c.l.b16 %v210
    %v799 = vunpack.c.h.b16 %v210
    %v800 = vunpack.c.l.b16 %v211
    %v801 = vunpack.c.h.b16 %v211
    %v802 = vunpack.c.l.b16 %v212
    %v803 = vunpack.c.h.b16 %v212
    %v804 = vunpack.c.l.b16 %v213
    %v805 = vunpack.c.h.b16 %v213
    %v806 = vunpack.c.l.b16 %v214
    %v807 = vunpack.c.h.b16 %v214
    %v808 = vunpack.c.l.b16 %v215
    %v809 = vunpack.c.h.b16 %v215
    %v810 = vunpack.c.l.b16 %v216
    %v811 = vunpack.c.h.b16 %v216
    %v812 = vunpack.c.l.b16 %v217
    %v813 = vunpack.c.h.b16 %v217
    %v814 = vunpack.c.l.b16 %v218
    %v815 = vunpack.c.h.b16 %v218
    %v816 = vunpack.c.l.b16 %v219
    %v817 = vunpack.c.h.b16 %v219
    %v818 = vunpack.c.l.b16 %v220
    %v819 = vunpack.c.h.b16 %v220
    %v820 = vunpack.c.l.b16 %v221
    %v821 = vunpack.c.h.b16 %v221
    %v822 = vunpack.c.l.b16 %v222
    %v823 = vunpack.c.h.b16 %v222
    %v824 = vunpack.c.l.b16 %v223
    %v825 = vunpack.c.h.b16 %v223
    %v826 = vunpack.c.l.b16 %v224
    %v827 = vunpack.c.h.b16 %v224
    %v828 = vunpack.c.l.b16 %v225
    %v829 = vunpack.c.h.b16 %v225
    %v830 = vunpack.c.l.b16 %v226
    %v831 = vunpack.c.h.b16 %v226
    %v832 = vunpack.c.l.b16 %v227
    %v833 = vunpack.c.h.b16 %v227
    %v834 = vunpack.c.l.b16 %v228
    %v835 = vunpack.c.h.b16 %v228
    %v836 = vunpack.c.l.b16 %v229
    %v837 = vunpack.c.h.b16 %v229
    %v838 = vunpack.c.l.b16 %v230
    %v839 = vunpack.c.h.b16 %v230
    %v840 = vunpack.c.l.b16 %v231
    %v841 = vunpack.c.h.b16 %v231
    %v842 = vunpack.c.l.b16 %v232
    %v843 = vunpack.c.h.b16 %v232
    %v844 = vunpack.c.l.b16 %v233
    %v845 = vunpack.c.h.b16 %v233
    %v846 = vunpack.c.l.b16 %v234
    %v847 = vunpack.c.h.b16 %v234
    %v848 = vunpack.c.l.b16 %v235
    %v849 = vunpack.c.h.b16 %v235
    %v850 = vunpack.c.l.b16 %v236
    %v851 = vunpack.c.h.b16 %v236
    %v852 = vunpack.c.l.b16 %v237
    %v853 = vunpack.c.h.b16 %v237
    %v854 = vunpack.c.l.b16 %v238
    %v855 = vunpack.c.h.b16 %v238
    %v856 = vunpack.c.l.b16 %v239
    %v857 = vunpack.c.h.b16 %v239
    %v858 = vunpack.c.l.b16 %v240
    %v859 = vunpack.c.h.b16 %v240
    %v860 = vunpack.c.l.b16 %v241
    %v861 = vunpack.c.h.b16 %v241
    %v862 = vunpack.c.l.b16 %v242
    %v863 = vunpack.c.h.b16 %v242
    %v864 = vunpack.c.l.b16 %v243
    %v865 = vunpack.c.h.b16 %v243
    %v866 = vunpack.c.l.b16 %v244
    %v867 = vunpack.c.h.b16 %v244
    %v868 = vunpack.c.l.b16 %v245
    %v869 = vunpack.c.h.b16 %v245
    %v870 = vunpack.c.l.b16 %v246
    %v871 = vunpack.c.h.b16 %v246
    %v872 = vunpack.c.l.b16 %v247
    %v873 = vunpack.c.h.b16 %v247
    %v874 = vunpack.c.l.b16 %v248
    %v875 = vunpack.c.h.b16 %v248
    %v876 = vunpack.c.l.b16 %v249
    %v877 = vunpack.c.h.b16 %v249
    %v878 = vunpack.c.l.b16 %v250
    %v879 = vunpack.c.h.b16 %v250
    %v880 = vunpack.c.l.b16 %v251
    %v881 = vunpack.c.h.b16 %v251
    %v882 = vunpack.c.l.b16 %v252
    %v883 = vunpack.c.h.b16 %v252
    %v884 = vunpack.c.l.b16 %v253
    %v885 = vunpack.c.h.b16 %v253
    %v886 = vunpack.c.l.b16 %v254
    %v887 = vunpack.c.h.b16 %v254
    %v888 = vunpack.c.l.b16 %v255
    %v889 = vunpack.c.h.b16 %v255
    %v890 = vunpack.c.l.b16 %v256
    %v891 = vunpack.c.h.b16 %v256
    %v892 = vunpack.c.l.b16 %v257
    %v893 = vunpack.c.h.b16 %v257
    %v894 = vunpack.c.l.b16 %v258
    %v895 = vunpack.c.h.b16 %v258
    %v896 = vunpack.c.l.b16 %v259
    %v897 = vunpack.c.h.b16 %v259
    %v898 = vunpack.c.l.b16 %v260
    %v899 = vunpack.c.h.b16 %v260
    %v900 = vunpack.c.l.b16 %v261
    %v901 = vunpack.c.h.b16 %v261
    %v902 = vunpack.c.l.b16 %v262
    %v903 = vunpack.c.h.b16 %v262
    %v904 = vunpack.c.l.b16 %v263
    %v905 = vunpack.c.h.b16 %v263
    %v906 = vunpack.c.l.b16 %v264
    %v907 = vunpack.c.h.b16 %v264
    %v908 = vunpack.c.l.b16 %v265
    %v909 = vunpack.c.h.b16 %v265
    %v910 = vunpack.c.l.b16 %v266
    %v911 = vunpack.c.h.b16 %v266
    %v912 = vunpack.c.l.b16 %v267
    %v913 = vunpack.c.h.b16 %v267
    %v914 = vunpack.c.l.b16 %v268
    %v915 = vunpack.c.h.b16 %v268
    %v916 = vunpack.c.l.b16 %v269
    %v917 = vunpack.c.h.b16 %v269
    %v918 = vunpack.c.l.b16 %v270
    %v919 = vunpack.c.h.b16 %v270
    %v920 = vunpack.c.l.b16 %v271
    %v921 = vunpack.c.h.b16 %v271
    %v922 = vunpack.c.l.b16 %v272
    %v923 = vunpack.c.h.b16 %v272
    %v924 = vunpack.c.l.b16 %v273
    %v925 = vunpack.c.h.b16 %v273
    %v926 = vunpack.c.l.b16 %v274
    %v927 = vunpack.c.h.b16 %v274
    %v928 = vunpack.c.l.b16 %v275
    %v929 = vunpack.c.h.b16 %v275
    %v930 = vunpack.c.l.b16 %v276
    %v931 = vunpack.c.h.b16 %v276
    %v932 = vunpack.c.l.b16 %v277
    %v933 = vunpack.c.h.b16 %v277
    %v934 = vunpack.c.l.b16 %v278
    %v935 = vunpack.c.h.b16 %v278
    %v936 = vunpack.c.l.b16 %v279
    %v937 = vunpack.c.h.b16 %v279
    %v938 = vunpack.c.l.b16 %v280
    %v939 = vunpack.c.h.b16 %v280
    %v940 = vunpack.c.l.b16 %v281
    %v941 = vunpack.c.h.b16 %v281
    %v942 = vunpack.c.l.b16 %v282
    %v943 = vunpack.c.h.b16 %v282
    %v944 = vunpack.c.l.b16 %v283
    %v945 = vunpack.c.h.b16 %v283
    %v946 = vunpack.c.l.b16 %v284
    %v947 = vunpack.c.h.b16 %v284
    %v948 = vunpack.c.l.b16 %v285
    %v949 = vunpack.c.h.b16 %v285
    %v950 = vunpack.c.l.b16 %v286
    %v951 = vunpack.c.h.b16 %v286
    %v952 = vunpack.c.l.b16 %v287
    %v953 = vunpack.c.h.b16 %v287
    %v954 = vunpack.c.l.b16 %v288
    %v955 = vunpack.c.h.b16 %v288
    %v956 = vunpack.c.l.b16 %v289
    %v957 = vunpack.c.h.b16 %v289
    %v958 = vunpack.c.l.b16 %v290
    %v959 = vunpack.c.h.b16 %v290
    %v960 = vunpack.c.l.b16 %v291
    %v961 = vunpack.c.h.b16 %v291
    %v962 = vunpack.c.l.b16 %v292
    %v963 = vunpack.c.h.b16 %v292
    %v964 = vunpack.c.l.b16 %v293
    %v965 = vunpack.c.h.b16 %v293
    %v966 = vunpack.c.l.b16 %v294
    %v967 = vunpack.c.h.b16 %v294
    %v968 = vunpack.c.l.b16 %v295
    %v969 = vunpack.c.h.b16 %v295
    %v970 = vunpack.c.l.b16 %v296
    %v971 = vunpack.c.h.b16 %v296
    %v972 = vunpack.c.l.b16 %v297
    %v973 = vunpack.c.h.b16 %v297
    %v974 = vunpack.c.l.b16 %v298
    %v975 = vunpack.c.h.b16 %v298
    %v976 = vunpack.c.l.b16 %v299
    %v977 = vunpack.c.h.b16 %v299
    %v978 = vunpack.c.l.b16 %v300
    %v979 = vunpack.c.h.b16 %v300
    %v980 = vunpack.c.l.b16 %v301
    %v981 = vunpack.c.h.b16 %v301
    %v982 = vunpack.c.l.b16 %v302
    %v983 = vunpack.c.h.b16 %v302
    %v984 = vunpack.c.l.b16 %v303
    %v985 = vunpack.c.h.b16 %v303
    %v986 = vunpack.c.l.b16 %v304
    %v987 = vunpack.c.h.b16 %v304
    %v988 = vunpack.c.l.b16 %v305
    %v989 = vunpack.c.h.b16 %v305
    %v990 = vunpack.c.l.b16 %v306
    %v991 = vunpack.c.h.b16 %v306
    %v992 = vunpack.c.l.b16 %v307
    %v993 = vunpack.c.h.b16 %v307
    %v994 = vunpack.c.l.b16 %v308
    %v995 = vunpack.c.h.b16 %v308
    %v996 = vunpack.c.l.b16 %v309
    %v997 = vunpack.c.h.b16 %v309
    %v998 = vunpack.c.l.b16 %v310
    %v999 = vunpack.c.h.b16 %v310
    %v1000 = vunpack.c.l.b16 %v311
    %v1001 = vunpack.c.h.b16 %v311
    %v1002 = vunpack.c.l.b16 %v312
    %v1003 = vunpack.c.h.b16 %v312
    %v1004 = vunpack.c.l.b16 %v313
    %v1005 = vunpack.c.h.b16 %v313
    %v1006 = vunpack.c.l.b16 %v314
    %v1007 = vunpack.c.h.b16 %v314
    %v1008 = vunpack.c.l.b16 %v315
    %v1009 = vunpack.c.h.b16 %v315
    %v1010 = vunpack.c.l.b16 %v316
    %v1011 = vunpack.c.h.b16 %v316
    %v1012 = vunpack.c.l.b16 %v317
    %v1013 = vunpack.c.h.b16 %v317
    %v1014 = vunpack.c.l.b16 %v318
    %v1015 = vunpack.c.h.b16 %v318
    %v1016 = vunpack.c.l.b16 %v319
    %v1017 = vunpack.c.h.b16 %v319
    %v1018 = vunpack.c.l.b16 %v320
    %v1019 = vunpack.c.h.b16 %v320
    %v1020 = vunpack.c.l.b16 %v321
    %v1021 = vunpack.c.h.b16 %v321
    %v1022 = vunpack.c.l.b16 %v322
    %v1023 = vunpack.c.h.b16 %v322
    %v1024 = vunpack.c.l.b16 %v323
    %v1025 = vunpack.c.h.b16 %v323
    %v1026 = vunpack.c.l.b16 %v324
    %v1027 = vunpack.c.h.b16 %v324
    %v1028 = vunpack.c.l.b16 %v325
    %v1029 = vunpack.c.h.b16 %v325
    %v1030 = vunpack.c.l.b16 %v326
    %v1031 = vunpack.c.h.b16 %v326
    %v1032 = vunpack.c.l.b16 %v327
    %v1033 = vunpack.c.h.b16 %v327
    %v1034 = vunpack.c.l.b16 %v328
    %v1035 = vunpack.c.h.b16 %v328
    %v1036 = vpack.c.b16 %v592, %v588
    %v1037 = vpack.c.b16 %v593, %v589
    %v1038 = vpack.c.b16 %v594, %v590
    %v1039 = vpack.c.b16 %v595, %v591
    %v1040 = vpack.c.b16 %v600, %v596
    %v1041 = vpack.c.b16 %v601, %v597
    %v1042 = vpack.c.b16 %v602, %v598
    %v1043 = vpack.c.b16 %v603, %v599
    %v1044 = vpack.c.b16 %v608, %v604
    %v1045 = vpack.c.b16 %v609, %v605
    %v1046 = vpack.c.b16 %v610, %v606
    %v1047 = vpack.c.b16 %v611, %v607
    %v1048 = vpack.c.b16 %v616, %v612
    %v1049 = vpack.c.b16 %v617, %v613
    %v1050 = vpack.c.b16 %v618, %v614
    %v1051 = vpack.c.b16 %v619, %v615
    %v1052 = vpack.c.b16 %v624, %v620
    %v1053 = vpack.c.b16 %v625, %v621
    %v1054 = vpack.c.b16 %v626, %v622
    %v1055 = vpack.c.b16 %v627, %v623
    %v1056 = vpack.c.b16 %v632, %v628
    %v1057 = vpack.c.b16 %v633, %v629
    %v1058 = vpack.c.b16 %v634, %v630
    %v1059 = vpack.c.b16 %v635, %v631
    %v1060 = vpack.c.b16 %v640, %v636
    %v1061 = vpack.c.b16 %v641, %v637
    %v1062 = vpack.c.b16 %v642, %v638
    %v1063 = vpack.c.b16 %v643, %v639
    %v1064 = vpack.c.b16 %v648, %v644
    %v1065 = vpack.c.b16 %v649, %v645
    %v1066 = vpack.c.b16 %v650, %v646
    %v1067 = vpack.c.b16 %v651, %v647
    %v1068 = vpack.c.b16 %v656, %v652
    %v1069 = vpack.c.b16 %v657, %v653
    %v1070 = vpack.c.b16 %v658, %v654
    %v1071 = vpack.c.b16 %v659, %v655
    %v1072 = vpack.c.b16 %v664, %v660
    %v1073 = vpack.c.b16 %v665, %v661
    %v1074 = vpack.c.b16 %v666, %v662
    %v1075 = vpack.c.b16 %v667, %v663
    %v1076 = vpack.c.b16 %v672, %v668
    %v1077 = vpack.c.b16 %v673, %v669
    %v1078 = vpack.c.b16 %v674, %v670
    %v1079 = vpack.c.b16 %v675, %v671
    %v1080 = vpack.c.b16 %v680, %v676
    %v1081 = vpack.c.b16 %v681, %v677
    %v1082 = vpack.c.b16 %v682, %v678
    %v1083 = vpack.c.b16 %v683, %v679
    %v1084 = vpack.c.b16 %v688, %v684
    %v1085 = vpack.c.b16 %v689, %v685
    %v1086 = vpack.c.b16 %v690, %v686
    %v1087 = vpack.c.b16 %v691, %v687
    %v1088 = vpack.c.b16 %v696, %v692
    %v1089 = vpack.c.b16 %v697, %v693
    %v1090 = vpack.c.b16 %v698, %v694
    %v1091 = vpack.c.b16 %v699, %v695
    %v1092 = vpack.c.b16 %v704, %v700
    %v1093 = vpack.c.b16 %v705, %v701
    %v1094 = vpack.c.b16 %v706, %v702
    %v1095 = vpack.c.b16 %v707, %v703
    %v1096 = vpack.c.b16 %v712, %v708
    %v1097 = vpack.c.b16 %v713, %v709
    %v1098 = vpack.c.b16 %v714, %v710
    %v1099 = vpack.c.b16 %v715, %v711
    %v1100 = vpack.c.b16 %v720, %v716
    %v1101 = vpack.c.b16 %v721, %v717
    %v1102 = vpack.c.b16 %v722, %v718
    %v1103 = vpack.c.b16 %v723, %v719
    %v1104 = vpack.c.b16 %v728, %v724
    %v1105 = vpack.c.b16 %v729, %v725
    %v1106 = vpack.c.b16 %v730, %v726
    %v1107 = vpack.c.b16 %v731, %v727
    %v1108 = vpack.c.b16 %v736, %v732
    %v1109 = vpack.c.b16 %v737, %v733
    %v1110 = vpack.c.b16 %v738, %v734
    %v1111 = vpack.c.b16 %v739, %v735
    %v1112 = vpack.c.b16 %v744, %v740
    %v1113 = vpack.c.b16 %v745, %v741
    %v1114 = vpack.c.b16 %v746, %v742
    %v1115 = vpack.c.b16 %v747, %v743
    %v1116 = vpack.c.b16 %v752, %v748
    %v1117 = vpack.c.b16 %v753, %v749
    %v1118 = vpack.c.b16 %v754, %v750
    %v1119 = vpack.c.b16 %v755, %v751
    %v1120 = vpack.c.b16 %v760, %v756
    %v1121 = vpack.c.b16 %v761, %v757
    %v1122 = vpack.c.b16 %v762, %v758
    %v1123 = vpack.c.b16 %v763, %v759
    %v1124 = vpack.c.b16 %v768, %v764
    %v1125 = vpack.c.b16 %v769, %v765
    %v1126 = vpack.c.b16 %v770, %v766
    %v1127 = vpack.c.b16 %v771, %v767
    %v1128 = vpack.c.b16 %v776, %v772
    %v1129 = vpack.c.b16 %v777, %v773
    %v1130 = vpack.c.b16 %v778, %v774
    %v1131 = vpack.c.b16 %v779, %v775
    %v1132 = vpack.c.b16 %v784, %v780
    %v1133 = vpack.c.b16 %v785, %v781
    %v1134 = vpack.c.b16 %v786, %v782
    %v1135 = vpack.c.b16 %v787, %v783
    %v1136 = vpack.c.b16 %v792, %v788
    %v1137 = vpack.c.b16 %v793, %v789
    %v1138 = vpack.c.b16 %v794, %v790
    %v1139 = vpack.c.b16 %v795, %v791
    %v1140 = vpack.c.b16 %v800, %v796
    %v1141 = vpack.c.b16 %v801, %v797
    %v1142 = vpack.c.b16 %v802, %v798
    %v1143 = vpack.c.b16 %v803, %v799
    %v1144 = vpack.c.b16 %v808, %v804
    %v1145 = vpack.c.b16 %v809, %v805
    %v1146 = vpack.c.b16 %v810, %v806
    %v1147 = vpack.c.b16 %v811, %v807
    %v1148 = vpack.c.b16 %v816, %v812
    %v1149 = vpack.c.b16 %v817, %v813
    %v1150 = vpack.c.b16 %v818, %v814
    %v1151 = vpack.c.b16 %v819, %v815
    %v1152 = vpack.c.b16 %v824, %v820
    %v1153 = vpack.c.b16 %v825, %v821
    %v1154 = vpack.c.b16 %v826, %v822
    %v1155 = vpack.c.b16 %v827, %v823
    %v1156 = vpack.c.b16 %v832, %v828
    %v1157 = vpack.c.b16 %v833, %v829
    %v1158 = vpack.c.b16 %v834, %v830
    %v1159 = vpack.c.b16 %v835, %v831
    %v1160 = vpack.c.b16 %v840, %v836
    %v1161 = vpack.c.b16 %v841, %v837
    %v1162 = vpack.c.b16 %v842, %v838
    %v1163 = vpack.c.b16 %v843, %v839
    %v1164 = vpack.c.b16 %v848, %v844
    %v1165 = vpack.c.b16 %v849, %v845
    %v1166 = vpack.c.b16 %v850, %v846
    %v1167 = vpack.c.b16 %v851, %v847
    %v1168 = vpack.c.b16 %v856, %v852
    %v1169 = vpack.c.b16 %v857, %v853
    %v1170 = vpack.c.b16 %v858, %v854
    %v1171 = vpack.c.b16 %v859, %v855
    %v1172 = vpack.c.b16 %v864, %v860
    %v1173 = vpack.c.b16 %v865, %v861
    %v1174 = vpack.c.b16 %v866, %v862
    %v1175 = vpack.c.b16 %v867, %v863
    %v1176 = vpack.c.b16 %v872, %v868
    %v1177 = vpack.c.b16 %v873, %v869
    %v1178 = vpack.c.b16 %v874, %v870
    %v1179 = vpack.c.b16 %v875, %v871
    %v1180 = vpack.c.b16 %v880, %v876
    %v1181 = vpack.c.b16 %v881, %v877
    %v1182 = vpack.c.b16 %v882, %v878
    %v1183 = vpack.c.b16 %v883, %v879
    %v1184 = vpack.c.b16 %v888, %v884
    %v1185 = vpack.c.b16 %v889, %v885
    %v1186 = vpack.c.b16 %v890, %v886
    %v1187 = vpack.c.b16 %v891, %v887
    %v1188 = vpack.c.b16 %v896, %v892
    %v1189 = vpack.c.b16 %v897, %v893
    %v1190 = vpack.c.b16 %v898, %v894
    %v1191 = vpack.c.b16 %v899, %v895
    %v1192 = vpack.c.b16 %v904, %v900
    %v1193 = vpack.c.b16 %v905, %v901
    %v1194 = vpack.c.b16 %v906, %v902
    %v1195 = vpack.c.b16 %v907, %v903
    %v1196 = vpack.c.b16 %v912, %v908
    %v1197 = vpack.c.b16 %v913, %v909
    %v1198 = vpack.c.b16 %v914, %v910
    %v1199 = vpack.c.b16 %v915, %v911
    %v1200 = vpack.c.b16 %v920, %v916
    %v1201 = vpack.c.b16 %v921, %v917
    %v1202 = vpack.c.b16 %v922, %v918
    %v1203 = vpack.c.b16 %v923, %v919
    %v1204 = vpack.c.b16 %v928, %v924
    %v1205 = vpack.c.b16 %v929, %v925
    %v1206 = vpack.c.b16 %v930, %v926
    %v1207 = vpack.c.b16 %v931, %v927
    %v1208 = vpack.c.b16 %v936, %v932
    %v1209 = vpack.c.b16 %v937, %v933
    %v1210 = vpack.c.b16 %v938, %v934
    %v1211 = vpack.c.b16 %v939, %v935
    %v1212 = vpack.c.b16 %v944, %v940
    %v1213 = vpack.c.b16 %v945, %v941
    %v1214 = vpack.c.b16 %v946, %v942
    %v1215 = vpack.c.b16 %v947, %v943
    %v1216 = vpack.c.b16 %v952, %v948
    %v1217 = vpack.c.b16 %v953, %v949
    %v1218 = vpack.c.b16 %v954, %v950
    %v1219 = vpack.c.b16 %v955, %v951
    %v1220 = vpack.c.b16 %v960, %v956
    %v1221 = vpack.c.b16 %v961, %v957
    %v1222 = vpack.c.b16 %v962, %v958
    %v1223 = vpack.c.b16 %v963, %v959
    %v1224 = vpack.c.b16 %v968, %v964
    %v1225 = vpack.c.b16 %v969, %v965
    %v1226 = vpack.c.b16 %v970, %v966
    %v1227 = vpack.c.b16 %v971, %v967
    %v1228 = vpack.c.b16 %v976, %v972
    %v1229 = vpack.c.b16 %v977, %v973
    %v1230 = vpack.c.b16 %v978, %v974
    %v1231 = vpack.c.b16 %v979, %v975
    %v1232 = vpack.c.b16 %v984, %v980
    %v1233 = vpack.c.b16 %v985, %v981
    %v1234 = vpack.c.b16 %v986, %v982
    %v1235 = vpack.c.b16 %v987, %v983
    %v1236 = vpack.c.b16 %v992, %v988
    %v1237 = vpack.c.b16 %v993, %v989
    %v1238 = vpack.c.b16 %v994, %v990
    %v1239 = vpack.c.b16 %v995, %v991
    %v1240 = vpack.c.b16 %v1000, %v996
    %v1241 = vpack.c.b16 %v1001, %v997
    %v1242 = vpack.c.b16 %v1002, %v998
    %v1243 = vpack.c.b16 %v1003, %v999
    %v1244 = vpack.c.b16 %v1008, %v1004
    %v1245 = vpack.c.b16 %v1009, %v1005
    %v1246 = vpack.c.b16 %v1010, %v1006
    %v1247 = vpack.c.b16 %v1011, %v1007
    %v1248 = vpack.c.b16 %v1016, %v1012
    %v1249 = vpack.c.b16 %v1017, %v1013
    %v1250 = vpack.c.b16 %v1018, %v1014
    %v1251 = vpack.c.b16 %v1019, %v1015
    %v1252 = vpack.c.b16 %v1024, %v1020
    %v1253 = vpack.c.b16 %v1025, %v1021
    %v1254 = vpack.c.b16 %v1026, %v1022
    %v1255 = vpack.c.b16 %v1027, %v1023
    %v1256 = vpack.c.b16 %v1032, %v1028
    %v1257 = vpack.c.b16 %v1033, %v1029
    %v1258 = vpack.c.b16 %v1034, %v1030
    %v1259 = vpack.c.b16 %v1035, %v1031
    %1484 = vmatpush.bf16.msra.mxu0 %v1064
    %1485 = vmatpush.bf16.msra.mxu0 %v1060
    %1486 = vmatpush.bf16.msra.mxu0 %v1056
    %1487 = vmatpush.bf16.msra.mxu0 %v1052
    %1488 = vmatpush.bf16.msra.mxu0 %v1048
    %1489 = vmatpush.bf16.msra.mxu0 %v1044
    %1490 = vmatpush.bf16.msra.mxu0 %v1040
    %1491 = vmatpush.bf16.msra.mxu0 %v1036
    %1492 = vmatmul.bf16.gmra.mxu0 %v350
    %v1493 = vpop.f32.mrf.mxu0
    %v1494 = vadd.f32 %v331, %v1493
    %v1495 = vpop.f32.mrf.mxu0
    %1496 = vdwg.mxu0
    %1497 = vmatpush.bf16.msra.mxu0 %v1096
    %1498 = vmatpush.bf16.msra.mxu0 %v1092
    %1499 = vmatpush.bf16.msra.mxu0 %v1088
    %1500 = vmatpush.bf16.msra.mxu0 %v1084
    %1501 = vmatpush.bf16.msra.mxu0 %v1080
    %1502 = vmatpush.bf16.msra.mxu0 %v1076
    %1503 = vmatpush.bf16.msra.mxu0 %v1072
    %1504 = vmatpush.bf16.msra.mxu0 %v1068
    %1505 = vmatmul.bf16.gmra.mxu0 %v351
    %v1506 = vpop.f32.mrf.mxu0
    %v1507 = vadd.f32 %v1494, %v1506
    %v1508 = vpop.f32.mrf.mxu0
    %1509 = vdwg.mxu0
    %1510 = vmatpush.bf16.msra.mxu0 %v1128
    %1511 = vmatpush.bf16.msra.mxu0 %v1124
    %1512 = vmatpush.bf16.msra.mxu0 %v1120
    %1513 = vmatpush.bf16.msra.mxu0 %v1116
    %1514 = vmatpush.bf16.msra.mxu0 %v1112
    %1515 = vmatpush.bf16.msra.mxu0 %v1108
    %1516 = vmatpush.bf16.msra.mxu0 %v1104
    %1517 = vmatpush.bf16.msra.mxu0 %v1100
    %1518 = vmatmul.bf16.gmra.mxu0 %v352
    %v1519 = vpop.f32.mrf.mxu0
    %v1520 = vadd.f32 %v1507, %v1519
    %v1521 = vpop.f32.mrf.mxu0
    %1522 = vdwg.mxu0
    %1523 = vmatpush.bf16.msra.mxu0 %v1160
    %1524 = vmatpush.bf16.msra.mxu0 %v1156
    %1525 = vmatpush.bf16.msra.mxu0 %v1152
    %1526 = vmatpush.bf16.msra.mxu0 %v1148
    %1527 = vmatpush.bf16.msra.mxu0 %v1144
    %1528 = vmatpush.bf16.msra.mxu0 %v1140
    %1529 = vmatpush.bf16.msra.mxu0 %v1136
    %1530 = vmatpush.bf16.msra.mxu0 %v1132
    %1531 = vmatmul.bf16.gmra.mxu0 %v353
    %v1532 = vpop.f32.mrf.mxu0
    %v1533 = vadd.f32 %v1520, %v1532
    %v1534 = vpop.f32.mrf.mxu0
    %1535 = vdwg.mxu0
    %1536 = vmatpush.bf16.msra.mxu0 %v1192
    %1537 = vmatpush.bf16.msra.mxu0 %v1188
    %1538 = vmatpush.bf16.msra.mxu0 %v1184
    %1539 = vmatpush.bf16.msra.mxu0 %v1180
    %1540 = vmatpush.bf16.msra.mxu0 %v1176
    %1541 = vmatpush.bf16.msra.mxu0 %v1172
    %1542 = vmatpush.bf16.msra.mxu0 %v1168
    %1543 = vmatpush.bf16.msra.mxu0 %v1164
    %1544 = vmatmul.bf16.gmra.mxu0 %v354
    %v1545 = vpop.f32.mrf.mxu0
    %v1546 = vadd.f32 %v1533, %v1545
    %v1547 = vpop.f32.mrf.mxu0
    %1548 = vdwg.mxu0
    %1549 = vmatpush.bf16.msra.mxu0 %v1224
    %1550 = vmatpush.bf16.msra.mxu0 %v1220
    %1551 = vmatpush.bf16.msra.mxu0 %v1216
    %1552 = vmatpush.bf16.msra.mxu0 %v1212
    %1553 = vmatpush.bf16.msra.mxu0 %v1208
    %1554 = vmatpush.bf16.msra.mxu0 %v1204
    %1555 = vmatpush.bf16.msra.mxu0 %v1200
    %1556 = vmatpush.bf16.msra.mxu0 %v1196
    %1557 = vmatmul.bf16.gmra.mxu0 %v355
    %v1558 = vpop.f32.mrf.mxu0
    %v1559 = vadd.f32 %v1546, %v1558
    %v1560 = vpop.f32.mrf.mxu0
    %1561 = vdwg.mxu0
    %1562 = vmatpush.bf16.msra.mxu0 %v1256
    %1563 = vmatpush.bf16.msra.mxu0 %v1252
    %1564 = vmatpush.bf16.msra.mxu0 %v1248
    %1565 = vmatpush.bf16.msra.mxu0 %v1244
    %1566 = vmatpush.bf16.msra.mxu0 %v1240
    %1567 = vmatpush.bf16.msra.mxu0 %v1236
    %1568 = vmatpush.bf16.msra.mxu0 %v1232
    %1569 = vmatpush.bf16.msra.mxu0 %v1228
    %1570 = vmatmul.bf16.gmra.mxu0 %v356
    %v1571 = vpop.f32.mrf.mxu0
    %v1572 = vadd.f32 %v1559, %v1571
    %v1573 = vpop.f32.mrf.mxu0
    %1574 = vdwg.mxu0
    %1575 = vmatpush.bf16.msra.mxu0 %v1065
    %1576 = vmatpush.bf16.msra.mxu0 %v1061
    %1577 = vmatpush.bf16.msra.mxu0 %v1057
    %1578 = vmatpush.bf16.msra.mxu0 %v1053
    %1579 = vmatpush.bf16.msra.mxu0 %v1049
    %1580 = vmatpush.bf16.msra.mxu0 %v1045
    %1581 = vmatpush.bf16.msra.mxu0 %v1041
    %1582 = vmatpush.bf16.msra.mxu0 %v1037
    %1583 = vmatmul.bf16.gmra.mxu0 %v350
    %v1584 = vpop.f32.mrf.mxu0
    %v1585 = vadd.f32 %v332, %v1584
    %v1586 = vpop.f32.mrf.mxu0
    %1587 = vdwg.mxu0
    %1588 = vmatpush.bf16.msra.mxu0 %v1097
    %1589 = vmatpush.bf16.msra.mxu0 %v1093
    %1590 = vmatpush.bf16.msra.mxu0 %v1089
    %1591 = vmatpush.bf16.msra.mxu0 %v1085
    %1592 = vmatpush.bf16.msra.mxu0 %v1081
    %1593 = vmatpush.bf16.msra.mxu0 %v1077
    %1594 = vmatpush.bf16.msra.mxu0 %v1073
    %1595 = vmatpush.bf16.msra.mxu0 %v1069
    %1596 = vmatmul.bf16.gmra.mxu0 %v351
    %v1597 = vpop.f32.mrf.mxu0
    %v1598 = vadd.f32 %v1585, %v1597
    %v1599 = vpop.f32.mrf.mxu0
    %1600 = vdwg.mxu0
    %1601 = vmatpush.bf16.msra.mxu0 %v1129
    %1602 = vmatpush.bf16.msra.mxu0 %v1125
    %1603 = vmatpush.bf16.msra.mxu0 %v1121
    %1604 = vmatpush.bf16.msra.mxu0 %v1117
    %1605 = vmatpush.bf16.msra.mxu0 %v1113
    %1606 = vmatpush.bf16.msra.mxu0 %v1109
    %1607 = vmatpush.bf16.msra.mxu0 %v1105
    %1608 = vmatpush.bf16.msra.mxu0 %v1101
    %1609 = vmatmul.bf16.gmra.mxu0 %v352
    %v1610 = vpop.f32.mrf.mxu0
    %v1611 = vadd.f32 %v1598, %v1610
    %v1612 = vpop.f32.mrf.mxu0
    %1613 = vdwg.mxu0
    %1614 = vmatpush.bf16.msra.mxu0 %v1161
    %1615 = vmatpush.bf16.msra.mxu0 %v1157
    %1616 = vmatpush.bf16.msra.mxu0 %v1153
    %1617 = vmatpush.bf16.msra.mxu0 %v1149
    %1618 = vmatpush.bf16.msra.mxu0 %v1145
    %1619 = vmatpush.bf16.msra.mxu0 %v1141
    %1620 = vmatpush.bf16.msra.mxu0 %v1137
    %1621 = vmatpush.bf16.msra.mxu0 %v1133
    %1622 = vmatmul.bf16.gmra.mxu0 %v353
    %v1623 = vpop.f32.mrf.mxu0
    %v1624 = vadd.f32 %v1611, %v1623
    %v1625 = vpop.f32.mrf.mxu0
    %1626 = vdwg.mxu0
    %1627 = vmatpush.bf16.msra.mxu0 %v1193
    %1628 = vmatpush.bf16.msra.mxu0 %v1189
    %1629 = vmatpush.bf16.msra.mxu0 %v1185
    %1630 = vmatpush.bf16.msra.mxu0 %v1181
    %1631 = vmatpush.bf16.msra.mxu0 %v1177
    %1632 = vmatpush.bf16.msra.mxu0 %v1173
    %1633 = vmatpush.bf16.msra.mxu0 %v1169
    %1634 = vmatpush.bf16.msra.mxu0 %v1165
    %1635 = vmatmul.bf16.gmra.mxu0 %v354
    %v1636 = vpop.f32.mrf.mxu0
    %v1637 = vadd.f32 %v1624, %v1636
    %v1638 = vpop.f32.mrf.mxu0
    %1639 = vdwg.mxu0
    %1640 = vmatpush.bf16.msra.mxu0 %v1225
    %1641 = vmatpush.bf16.msra.mxu0 %v1221
    %1642 = vmatpush.bf16.msra.mxu0 %v1217
    %1643 = vmatpush.bf16.msra.mxu0 %v1213
    %1644 = vmatpush.bf16.msra.mxu0 %v1209
    %1645 = vmatpush.bf16.msra.mxu0 %v1205
    %1646 = vmatpush.bf16.msra.mxu0 %v1201
    %1647 = vmatpush.bf16.msra.mxu0 %v1197
    %1648 = vmatmul.bf16.gmra.mxu0 %v355
    %v1649 = vpop.f32.mrf.mxu0
    %v1650 = vadd.f32 %v1637, %v1649
    %v1651 = vpop.f32.mrf.mxu0
    %1652 = vdwg.mxu0
    %1653 = vmatpush.bf16.msra.mxu0 %v1257
    %1654 = vmatpush.bf16.msra.mxu0 %v1253
    %1655 = vmatpush.bf16.msra.mxu0 %v1249
    %1656 = vmatpush.bf16.msra.mxu0 %v1245
    %1657 = vmatpush.bf16.msra.mxu0 %v1241
    %1658 = vmatpush.bf16.msra.mxu0 %v1237
    %1659 = vmatpush.bf16.msra.mxu0 %v1233
    %1660 = vmatpush.bf16.msra.mxu0 %v1229
    %1661 = vmatmul.bf16.gmra.mxu0 %v356
    %v1662 = vpop.f32.mrf.mxu0
    %v1663 = vadd.f32 %v1650, %v1662
    %v1664 = vpop.f32.mrf.mxu0
    %1665 = vdwg.mxu0
    %1666 = vmatpush.bf16.msra.mxu0 %v1066
    %1667 = vmatpush.bf16.msra.mxu0 %v1062
    %1668 = vmatpush.bf16.msra.mxu0 %v1058
    %1669 = vmatpush.bf16.msra.mxu0 %v1054
    %1670 = vmatpush.bf16.msra.mxu0 %v1050
    %1671 = vmatpush.bf16.msra.mxu0 %v1046
    %1672 = vmatpush.bf16.msra.mxu0 %v1042
    %1673 = vmatpush.bf16.msra.mxu0 %v1038
    %1674 = vmatmul.bf16.gmra.mxu0 %v350
    %v1675 = vpop.f32.mrf.mxu0
    %v1676 = vadd.f32 %v333, %v1675
    %v1677 = vpop.f32.mrf.mxu0
    %1678 = vdwg.mxu0
    %1679 = vmatpush.bf16.msra.mxu0 %v1098
    %1680 = vmatpush.bf16.msra.mxu0 %v1094
    %1681 = vmatpush.bf16.msra.mxu0 %v1090
    %1682 = vmatpush.bf16.msra.mxu0 %v1086
    %1683 = vmatpush.bf16.msra.mxu0 %v1082
    %1684 = vmatpush.bf16.msra.mxu0 %v1078
    %1685 = vmatpush.bf16.msra.mxu0 %v1074
    %1686 = vmatpush.bf16.msra.mxu0 %v1070
    %1687 = vmatmul.bf16.gmra.mxu0 %v351
    %v1688 = vpop.f32.mrf.mxu0
    %v1689 = vadd.f32 %v1676, %v1688
    %v1690 = vpop.f32.mrf.mxu0
    %1691 = vdwg.mxu0
    %1692 = vmatpush.bf16.msra.mxu0 %v1130
    %1693 = vmatpush.bf16.msra.mxu0 %v1126
    %1694 = vmatpush.bf16.msra.mxu0 %v1122
    %1695 = vmatpush.bf16.msra.mxu0 %v1118
    %1696 = vmatpush.bf16.msra.mxu0 %v1114
    %1697 = vmatpush.bf16.msra.mxu0 %v1110
    %1698 = vmatpush.bf16.msra.mxu0 %v1106
    %1699 = vmatpush.bf16.msra.mxu0 %v1102
    %1700 = vmatmul.bf16.gmra.mxu0 %v352
    %v1701 = vpop.f32.mrf.mxu0
    %v1702 = vadd.f32 %v1689, %v1701
    %v1703 = vpop.f32.mrf.mxu0
    %1704 = vdwg.mxu0
    %1705 = vmatpush.bf16.msra.mxu0 %v1162
    %1706 = vmatpush.bf16.msra.mxu0 %v1158
    %1707 = vmatpush.bf16.msra.mxu0 %v1154
    %1708 = vmatpush.bf16.msra.mxu0 %v1150
    %1709 = vmatpush.bf16.msra.mxu0 %v1146
    %1710 = vmatpush.bf16.msra.mxu0 %v1142
    %1711 = vmatpush.bf16.msra.mxu0 %v1138
    %1712 = vmatpush.bf16.msra.mxu0 %v1134
    %1713 = vmatmul.bf16.gmra.mxu0 %v353
    %v1714 = vpop.f32.mrf.mxu0
    %v1715 = vadd.f32 %v1702, %v1714
    %v1716 = vpop.f32.mrf.mxu0
    %1717 = vdwg.mxu0
    %1718 = vmatpush.bf16.msra.mxu0 %v1194
    %1719 = vmatpush.bf16.msra.mxu0 %v1190
    %1720 = vmatpush.bf16.msra.mxu0 %v1186
    %1721 = vmatpush.bf16.msra.mxu0 %v1182
    %1722 = vmatpush.bf16.msra.mxu0 %v1178
    %1723 = vmatpush.bf16.msra.mxu0 %v1174
    %1724 = vmatpush.bf16.msra.mxu0 %v1170
    %1725 = vmatpush.bf16.msra.mxu0 %v1166
    %1726 = vmatmul.bf16.gmra.mxu0 %v354
    %v1727 = vpop.f32.mrf.mxu0
    %v1728 = vadd.f32 %v1715, %v1727
    %v1729 = vpop.f32.mrf.mxu0
    %1730 = vdwg.mxu0
    %1731 = vmatpush.bf16.msra.mxu0 %v1226
    %1732 = vmatpush.bf16.msra.mxu0 %v1222
    %1733 = vmatpush.bf16.msra.mxu0 %v1218
    %1734 = vmatpush.bf16.msra.mxu0 %v1214
    %1735 = vmatpush.bf16.msra.mxu0 %v1210
    %1736 = vmatpush.bf16.msra.mxu0 %v1206
    %1737 = vmatpush.bf16.msra.mxu0 %v1202
    %1738 = vmatpush.bf16.msra.mxu0 %v1198
    %1739 = vmatmul.bf16.gmra.mxu0 %v355
    %v1740 = vpop.f32.mrf.mxu0
    %v1741 = vadd.f32 %v1728, %v1740
    %v1742 = vpop.f32.mrf.mxu0
    %1743 = vdwg.mxu0
    %1744 = vmatpush.bf16.msra.mxu0 %v1258
    %1745 = vmatpush.bf16.msra.mxu0 %v1254
    %1746 = vmatpush.bf16.msra.mxu0 %v1250
    %1747 = vmatpush.bf16.msra.mxu0 %v1246
    %1748 = vmatpush.bf16.msra.mxu0 %v1242
    %1749 = vmatpush.bf16.msra.mxu0 %v1238
    %1750 = vmatpush.bf16.msra.mxu0 %v1234
    %1751 = vmatpush.bf16.msra.mxu0 %v1230
    %1752 = vmatmul.bf16.gmra.mxu0 %v356
    %v1753 = vpop.f32.mrf.mxu0
    %v1754 = vadd.f32 %v1741, %v1753
    %v1755 = vpop.f32.mrf.mxu0
    %1756 = vdwg.mxu0
    %1757 = vmatpush.bf16.msra.mxu0 %v1067
    %1758 = vmatpush.bf16.msra.mxu0 %v1063
    %1759 = vmatpush.bf16.msra.mxu0 %v1059
    %1760 = vmatpush.bf16.msra.mxu0 %v1055
    %1761 = vmatpush.bf16.msra.mxu0 %v1051
    %1762 = vmatpush.bf16.msra.mxu0 %v1047
    %1763 = vmatpush.bf16.msra.mxu0 %v1043
    %1764 = vmatpush.bf16.msra.mxu0 %v1039
    %1765 = vmatmul.bf16.gmra.mxu0 %v350
    %v1766 = vpop.f32.mrf.mxu0
    %v1767 = vadd.f32 %v334, %v1766
    %v1768 = vpop.f32.mrf.mxu0
    %1769 = vdwg.mxu0
    %1770 = vmatpush.bf16.msra.mxu0 %v1099
    %1771 = vmatpush.bf16.msra.mxu0 %v1095
    %1772 = vmatpush.bf16.msra.mxu0 %v1091
    %1773 = vmatpush.bf16.msra.mxu0 %v1087
    %1774 = vmatpush.bf16.msra.mxu0 %v1083
    %1775 = vmatpush.bf16.msra.mxu0 %v1079
    %1776 = vmatpush.bf16.msra.mxu0 %v1075
    %1777 = vmatpush.bf16.msra.mxu0 %v1071
    %1778 = vmatmul.bf16.gmra.mxu0 %v351
    %v1779 = vpop.f32.mrf.mxu0
    %v1780 = vadd.f32 %v1767, %v1779
    %v1781 = vpop.f32.mrf.mxu0
    %1782 = vdwg.mxu0
    %1783 = vmatpush.bf16.msra.mxu0 %v1131
    %1784 = vmatpush.bf16.msra.mxu0 %v1127
    %1785 = vmatpush.bf16.msra.mxu0 %v1123
    %1786 = vmatpush.bf16.msra.mxu0 %v1119
    %1787 = vmatpush.bf16.msra.mxu0 %v1115
    %1788 = vmatpush.bf16.msra.mxu0 %v1111
    %1789 = vmatpush.bf16.msra.mxu0 %v1107
    %1790 = vmatpush.bf16.msra.mxu0 %v1103
    %1791 = vmatmul.bf16.gmra.mxu0 %v352
    %v1792 = vpop.f32.mrf.mxu0
    %v1793 = vadd.f32 %v1780, %v1792
    %v1794 = vpop.f32.mrf.mxu0
    %1795 = vdwg.mxu0
    %1796 = vmatpush.bf16.msra.mxu0 %v1163
    %1797 = vmatpush.bf16.msra.mxu0 %v1159
    %1798 = vmatpush.bf16.msra.mxu0 %v1155
    %1799 = vmatpush.bf16.msra.mxu0 %v1151
    %1800 = vmatpush.bf16.msra.mxu0 %v1147
    %1801 = vmatpush.bf16.msra.mxu0 %v1143
    %1802 = vmatpush.bf16.msra.mxu0 %v1139
    %1803 = vmatpush.bf16.msra.mxu0 %v1135
    %1804 = vmatmul.bf16.gmra.mxu0 %v353
    %v1805 = vpop.f32.mrf.mxu0
    %v1806 = vadd.f32 %v1793, %v1805
    %v1807 = vpop.f32.mrf.mxu0
    %1808 = vdwg.mxu0
    %1809 = vmatpush.bf16.msra.mxu0 %v1195
    %1810 = vmatpush.bf16.msra.mxu0 %v1191
    %1811 = vmatpush.bf16.msra.mxu0 %v1187
    %1812 = vmatpush.bf16.msra.mxu0 %v1183
    %1813 = vmatpush.bf16.msra.mxu0 %v1179
    %1814 = vmatpush.bf16.msra.mxu0 %v1175
    %1815 = vmatpush.bf16.msra.mxu0 %v1171
    %1816 = vmatpush.bf16.msra.mxu0 %v1167
    %1817 = vmatmul.bf16.gmra.mxu0 %v354
    %v1818 = vpop.f32.mrf.mxu0
    %v1819 = vadd.f32 %v1806, %v1818
    %v1820 = vpop.f32.mrf.mxu0
    %1821 = vdwg.mxu0
    %1822 = vmatpush.bf16.msra.mxu0 %v1227
    %1823 = vmatpush.bf16.msra.mxu0 %v1223
    %1824 = vmatpush.bf16.msra.mxu0 %v1219
    %1825 = vmatpush.bf16.msra.mxu0 %v1215
    %1826 = vmatpush.bf16.msra.mxu0 %v1211
    %1827 = vmatpush.bf16.msra.mxu0 %v1207
    %1828 = vmatpush.bf16.msra.mxu0 %v1203
    %1829 = vmatpush.bf16.msra.mxu0 %v1199
    %1830 = vmatmul.bf16.gmra.mxu0 %v355
    %v1831 = vpop.f32.mrf.mxu0
    %v1832 = vadd.f32 %v1819, %v1831
    %v1833 = vpop.f32.mrf.mxu0
    %1834 = vdwg.mxu0
    %1835 = vmatpush.bf16.msra.mxu0 %v1259
    %1836 = vmatpush.bf16.msra.mxu0 %v1255
    %1837 = vmatpush.bf16.msra.mxu0 %v1251
    %1838 = vmatpush.bf16.msra.mxu0 %v1247
    %1839 = vmatpush.bf16.msra.mxu0 %v1243
    %1840 = vmatpush.bf16.msra.mxu0 %v1239
    %1841 = vmatpush.bf16.msra.mxu0 %v1235
    %1842 = vmatpush.bf16.msra.mxu0 %v1231
    %1843 = vmatmul.bf16.gmra.mxu0 %v356
    %v1844 = vpop.f32.mrf.mxu0
    %v1845 = vadd.f32 %v1832, %v1844
    %v1846 = vpop.f32.mrf.mxu0
    %1847 = vdwg.mxu0
    %v1848 = vmax.f32 %v1572, 0.0
    %v1849 = vmax.f32 %v1663, 0.0
    %v1850 = vmax.f32 %v1754, 0.0
    %v1851 = vmax.f32 %v1845, 0.0
    %v1852 = vpack.c.bf16 %v1848, %v1848
    %v1853 = vpack.c.bf16 %v1849, %v1849
    %v1854 = vpack.c.bf16 %v1850, %v1850
    %v1855 = vpack.c.bf16 %v1851, %v1851
    %v1856 = vld [vmem:[#allocation8] sm:$0xf]
    %v1857 = vld [vmem:[#allocation8 + $0x4] sm:$0xf]
    %v1858 = vld [vmem:[#allocation8 + $0x8] sm:$0xf]
    %v1859 = vld [vmem:[#allocation8 + $0xc] sm:$0xf]
    %v1860 = vld [vmem:[#allocation8 + $0x10] sm:$0xf]
    %v1861 = vld [vmem:[#allocation8 + $0x14] sm:$0xf]
    %v1862 = vld [vmem:[#allocation8 + $0x18] sm:$0xf]
    %v1863 = vld [vmem:[#allocation8 + $0x1c] sm:$0xf]
    %v1864 = vld [vmem:[#allocation8 + $0x20] sm:$0xf]
    %v1865 = vld [vmem:[#allocation8 + $0x24] sm:$0xf]
    %v1866 = vld [vmem:[#allocation8 + $0x28] sm:$0xf]
    %v1867 = vld [vmem:[#allocation8 + $0x2c] sm:$0xf]
    %v1868 = vld [vmem:[#allocation8 + $0x30] sm:$0xf]
    %v1869 = vld [vmem:[#allocation8 + $0x34] sm:$0xf]
    %v1870 = vld [vmem:[#allocation8 + $0x38] sm:$0xf]
    %v1871 = vld [vmem:[#allocation8 + $0x3c] sm:$0xf]
    %v1872 = vld [vmem:[#allocation8 + $0x40] sm:$0xf]
    %v1873 = vld [vmem:[#allocation8 + $0x44] sm:$0xf]
    %v1874 = vld [vmem:[#allocation8 + $0x48] sm:$0xf]
    %v1875 = vld [vmem:[#allocation8 + $0x4c] sm:$0xf]
    %v1876 = vld [vmem:[#allocation8 + $0x50] sm:$0xf]
    %v1877 = vld [vmem:[#allocation8 + $0x54] sm:$0xf]
    %v1878 = vld [vmem:[#allocation8 + $0x58] sm:$0xf]
    %v1879 = vld [vmem:[#allocation8 + $0x5c] sm:$0xf]
    %v1880 = vld [vmem:[#allocation8 + $0x60] sm:$0xf]
    %v1881 = vld [vmem:[#allocation8 + $0x64] sm:$0xf]
    %v1882 = vld [vmem:[#allocation8 + $0x68] sm:$0xf]
    %v1883 = vld [vmem:[#allocation8 + $0x6c] sm:$0xf]
    %v1884 = vld [vmem:[#allocation8 + $0x70] sm:$0xf]
    %v1885 = vld [vmem:[#allocation8 + $0x74] sm:$0xf]
    %v1886 = vld [vmem:[#allocation8 + $0x78] sm:$0xf]
    %v1887 = vld [vmem:[#allocation8 + $0x7c] sm:$0xf]
    %v1888 = vld [vmem:[#allocation8 + $0x80] sm:$0xf]
    %v1889 = vld [vmem:[#allocation8 + $0x84] sm:$0xf]
    %v1890 = vld [vmem:[#allocation8 + $0x88] sm:$0xf]
    %v1891 = vld [vmem:[#allocation8 + $0x8c] sm:$0xf]
    %v1892 = vld [vmem:[#allocation8 + $0x90] sm:$0xf]
    %v1893 = vld [vmem:[#allocation8 + $0x94] sm:$0xf]
    %v1894 = vld [vmem:[#allocation8 + $0x98] sm:$0xf]
    %v1895 = vld [vmem:[#allocation8 + $0x9c] sm:$0xf]
    %v1896 = vld [vmem:[#allocation8 + $0xa0] sm:$0xf]
    %v1897 = vld [vmem:[#allocation8 + $0xa4] sm:$0xf]
    %v1898 = vld [vmem:[#allocation8 + $0xa8] sm:$0xf]
    %v1899 = vld [vmem:[#allocation8 + $0xac] sm:$0xf]
    %v1900 = vld [vmem:[#allocation8 + $0xb0] sm:$0xf]
    %v1901 = vld [vmem:[#allocation8 + $0xb4] sm:$0xf]
    %v1902 = vld [vmem:[#allocation8 + $0xb8] sm:$0xf]
    %v1903 = vld [vmem:[#allocation8 + $0xbc] sm:$0xf]
    %v1904 = vld [vmem:[#allocation8 + $0xc0] sm:$0xf]
    %v1905 = vld [vmem:[#allocation8 + $0xc4] sm:$0xf]
    %v1906 = vld [vmem:[#allocation8 + $0xc8] sm:$0xf]
    %v1907 = vld [vmem:[#allocation8 + $0xcc] sm:$0xf]
    %v1908 = vld [vmem:[#allocation8 + $0xd0] sm:$0xf]
    %v1909 = vld [vmem:[#allocation8 + $0xd4] sm:$0xf]
    %v1910 = vld [vmem:[#allocation8 + $0xd8] sm:$0xf]
    %v1911 = vld [vmem:[#allocation8 + $0xdc] sm:$0xf]
    %v1912 = vld [vmem:[#allocation8 + $0xe0] sm:$0xf]
    %v1913 = vld [vmem:[#allocation8 + $0xe4] sm:$0xf]
    %v1914 = vld [vmem:[#allocation8 + $0xe8] sm:$0xf]
    %v1915 = vld [vmem:[#allocation8 + $0xec] sm:$0xf]
    %v1916 = vld [vmem:[#allocation8 + $0xf0] sm:$0xf]
    %v1917 = vld [vmem:[#allocation8 + $0xf4] sm:$0xf]
    %v1918 = vld [vmem:[#allocation8 + $0xf8] sm:$0xf]
    %v1919 = vld [vmem:[#allocation8 + $0xfc] sm:$0xf]
    %v1920 = vld [vmem:[%s4] sm:$0x1]
    %v1922 = vperm.slane %v1920, 0
    %v1988 = vunpack.c.l.b16 %v1856
    %v1989 = vunpack.c.l.b16 %v1857
    %v1990 = vunpack.c.l.b16 %v1858
    %v1991 = vunpack.c.l.b16 %v1859
    %v1992 = vunpack.c.l.b16 %v1860
    %v1993 = vunpack.c.l.b16 %v1861
    %v1994 = vunpack.c.l.b16 %v1862
    %v1995 = vunpack.c.l.b16 %v1863
    %v1996 = vunpack.c.l.b16 %v1864
    %v1997 = vunpack.c.l.b16 %v1865
    %v1998 = vunpack.c.l.b16 %v1866
    %v1999 = vunpack.c.l.b16 %v1867
    %v2000 = vunpack.c.l.b16 %v1868
    %v2001 = vunpack.c.l.b16 %v1869
    %v2002 = vunpack.c.l.b16 %v1870
    %v2003 = vunpack.c.l.b16 %v1871
    %v2004 = vunpack.c.l.b16 %v1872
    %v2005 = vunpack.c.l.b16 %v1873
    %v2006 = vunpack.c.l.b16 %v1874
    %v2007 = vunpack.c.l.b16 %v1875
    %v2008 = vunpack.c.l.b16 %v1876
    %v2009 = vunpack.c.l.b16 %v1877
    %v2010 = vunpack.c.l.b16 %v1878
    %v2011 = vunpack.c.l.b16 %v1879
    %v2012 = vunpack.c.l.b16 %v1880
    %v2013 = vunpack.c.l.b16 %v1881
    %v2014 = vunpack.c.l.b16 %v1882
    %v2015 = vunpack.c.l.b16 %v1883
    %v2016 = vunpack.c.l.b16 %v1884
    %v2017 = vunpack.c.l.b16 %v1885
    %v2018 = vunpack.c.l.b16 %v1886
    %v2019 = vunpack.c.l.b16 %v1887
    %v2020 = vunpack.c.l.b16 %v1888
    %v2021 = vunpack.c.l.b16 %v1889
    %v2022 = vunpack.c.l.b16 %v1890
    %v2023 = vunpack.c.l.b16 %v1891
    %v2024 = vunpack.c.l.b16 %v1892
    %v2025 = vunpack.c.l.b16 %v1893
    %v2026 = vunpack.c.l.b16 %v1894
    %v2027 = vunpack.c.l.b16 %v1895
    %v2028 = vunpack.c.l.b16 %v1896
    %v2029 = vunpack.c.l.b16 %v1897
    %v2030 = vunpack.c.l.b16 %v1898
    %v2031 = vunpack.c.l.b16 %v1899
    %v2032 = vunpack.c.l.b16 %v1900
    %v2033 = vunpack.c.l.b16 %v1901
    %v2034 = vunpack.c.l.b16 %v1902
    %v2035 = vunpack.c.l.b16 %v1903
    %v2036 = vunpack.c.l.b16 %v1904
    %v2037 = vunpack.c.l.b16 %v1905
    %v2038 = vunpack.c.l.b16 %v1906
    %v2039 = vunpack.c.l.b16 %v1907
    %v2040 = vunpack.c.l.b16 %v1908
    %v2041 = vunpack.c.l.b16 %v1909
    %v2042 = vunpack.c.l.b16 %v1910
    %v2043 = vunpack.c.l.b16 %v1911
    %v2044 = vunpack.c.l.b16 %v1912
    %v2045 = vunpack.c.l.b16 %v1913
    %v2046 = vunpack.c.l.b16 %v1914
    %v2047 = vunpack.c.l.b16 %v1915
    %v2048 = vunpack.c.l.b16 %v1916
    %v2049 = vunpack.c.l.b16 %v1917
    %v2050 = vunpack.c.l.b16 %v1918
    %v2051 = vunpack.c.l.b16 %v1919
    %v2052 = vpack.c.b16 %v1989, %v1988
    %v2053 = vpack.c.b16 %v1991, %v1990
    %v2054 = vpack.c.b16 %v1993, %v1992
    %v2055 = vpack.c.b16 %v1995, %v1994
    %v2056 = vpack.c.b16 %v1997, %v1996
    %v2057 = vpack.c.b16 %v1999, %v1998
    %v2058 = vpack.c.b16 %v2001, %v2000
    %v2059 = vpack.c.b16 %v2003, %v2002
    %v2060 = vpack.c.b16 %v2005, %v2004
    %v2061 = vpack.c.b16 %v2007, %v2006
    %v2062 = vpack.c.b16 %v2009, %v2008
    %v2063 = vpack.c.b16 %v2011, %v2010
    %v2064 = vpack.c.b16 %v2013, %v2012
    %v2065 = vpack.c.b16 %v2015, %v2014
    %v2066 = vpack.c.b16 %v2017, %v2016
    %v2067 = vpack.c.b16 %v2019, %v2018
    %v2068 = vpack.c.b16 %v2021, %v2020
    %v2069 = vpack.c.b16 %v2023, %v2022
    %v2070 = vpack.c.b16 %v2025, %v2024
    %v2071 = vpack.c.b16 %v2027, %v2026
    %v2072 = vpack.c.b16 %v2029, %v2028
    %v2073 = vpack.c.b16 %v2031, %v2030
    %v2074 = vpack.c.b16 %v2033, %v2032
    %v2075 = vpack.c.b16 %v2035, %v2034
    %v2076 = vpack.c.b16 %v2037, %v2036
    %v2077 = vpack.c.b16 %v2039, %v2038
    %v2078 = vpack.c.b16 %v2041, %v2040
    %v2079 = vpack.c.b16 %v2043, %v2042
    %v2080 = vpack.c.b16 %v2045, %v2044
    %v2081 = vpack.c.b16 %v2047, %v2046
    %v2082 = vpack.c.b16 %v2049, %v2048
    %v2083 = vpack.c.b16 %v2051, %v2050
    %2116 = vmatpush.bf16.msra.mxu0 %v2059
    %2117 = vmatpush.bf16.msra.mxu0 %v2058
    %2118 = vmatpush.bf16.msra.mxu0 %v2057
    %2119 = vmatpush.bf16.msra.mxu0 %v2056
    %2120 = vmatpush.bf16.msra.mxu0 %v2055
    %2121 = vmatpush.bf16.msra.mxu0 %v2054
    %2122 = vmatpush.bf16.msra.mxu0 %v2053
    %2123 = vmatpush.bf16.msra.mxu0 %v2052
    %2124 = vmatmul.bf16.gmra.mxu0 %v1852
    %v2125 = vpop.f32.mrf.mxu0
    %v2126 = vadd.f32 %v1922, %v2125
    %v2127 = vpop.f32.mrf.mxu0
    %2128 = vdwg.mxu0
    %2129 = vmatpush.bf16.msra.mxu0 %v2067
    %2130 = vmatpush.bf16.msra.mxu0 %v2066
    %2131 = vmatpush.bf16.msra.mxu0 %v2065
    %2132 = vmatpush.bf16.msra.mxu0 %v2064
    %2133 = vmatpush.bf16.msra.mxu0 %v2063
    %2134 = vmatpush.bf16.msra.mxu0 %v2062
    %2135 = vmatpush.bf16.msra.mxu0 %v2061
    %2136 = vmatpush.bf16.msra.mxu0 %v2060
    %2137 = vmatmul.bf16.gmra.mxu0 %v1853
    %v2138 = vpop.f32.mrf.mxu0
    %v2139 = vadd.f32 %v2126, %v2138
    %v2140 = vpop.f32.mrf.mxu0
    %2141 = vdwg.mxu0
    %2142 = vmatpush.bf16.msra.mxu0 %v2075
    %2143 = vmatpush.bf16.msra.mxu0 %v2074
    %2144 = vmatpush.bf16.msra.mxu0 %v2073
    %2145 = vmatpush.bf16.msra.mxu0 %v2072
    %2146 = vmatpush.bf16.msra.mxu0 %v2071
    %2147 = vmatpush.bf16.msra.mxu0 %v2070
    %2148 = vmatpush.bf16.msra.mxu0 %v2069
    %2149 = vmatpush.bf16.msra.mxu0 %v2068
    %2150 = vmatmul.bf16.gmra.mxu0 %v1854
    %v2151 = vpop.f32.mrf.mxu0
    %v2152 = vadd.f32 %v2139, %v2151
    %v2153 = vpop.f32.mrf.mxu0
    %2154 = vdwg.mxu0
    %2155 = vmatpush.bf16.msra.mxu0 %v2083
    %2156 = vmatpush.bf16.msra.mxu0 %v2082
    %2157 = vmatpush.bf16.msra.mxu0 %v2081
    %2158 = vmatpush.bf16.msra.mxu0 %v2080
    %2159 = vmatpush.bf16.msra.mxu0 %v2079
    %2160 = vmatpush.bf16.msra.mxu0 %v2078
    %2161 = vmatpush.bf16.msra.mxu0 %v2077
    %2162 = vmatpush.bf16.msra.mxu0 %v2076
    %2163 = vmatmul.bf16.gmra.mxu0 %v1855
    %v2164 = vpop.f32.mrf.mxu0
    %v2165 = vadd.f32 %v2152, %v2164
    %v2166 = vpop.f32.mrf.mxu0
    %2167 = vdwg.mxu0
    %v2168 = vmax.f32 %v2165, 0.0
    %v2169 = vpack.c.bf16 %v2168, %v2168
    %v2170 = vld [vmem:[#allocation10] sm:$0xf]
    %v2171 = vld [vmem:[#allocation10 + $0x4] sm:$0xf]
    %v2172 = vld [vmem:[#allocation10 + $0x8] sm:$0xf]
    %v2173 = vld [vmem:[#allocation10 + $0xc] sm:$0xf]
    %v2174 = vld [vmem:[#allocation10 + $0x10] sm:$0xf]
    %v2175 = vld [vmem:[#allocation10 + $0x14] sm:$0xf]
    %v2176 = vld [vmem:[#allocation10 + $0x18] sm:$0xf]
    %v2177 = vld [vmem:[#allocation10 + $0x1c] sm:$0xf]
    %v2178 = vld [vmem:[#allocation10 + $0x20] sm:$0xf]
    %v2179 = vld [vmem:[#allocation10 + $0x24] sm:$0xf]
    %v2180 = vld [vmem:[#allocation10 + $0x28] sm:$0xf]
    %v2181 = vld [vmem:[#allocation10 + $0x2c] sm:$0xf]
    %v2182 = vld [vmem:[#allocation10 + $0x30] sm:$0xf]
    %v2183 = vld [vmem:[#allocation10 + $0x34] sm:$0xf]
    %v2184 = vld [vmem:[#allocation10 + $0x38] sm:$0xf]
    %v2185 = vld [vmem:[#allocation10 + $0x3c] sm:$0xf]
    %v2186 = vld [vmem:[%s6] sm:$0x1]
    %v2188 = vperm.slane %v2186, 0
    %v2206 = vunpack.c.l.b16 %v2170
    %v2207 = vunpack.c.l.b16 %v2171
    %v2208 = vunpack.c.l.b16 %v2172
    %v2209 = vunpack.c.l.b16 %v2173
    %v2210 = vunpack.c.l.b16 %v2174
    %v2211 = vunpack.c.l.b16 %v2175
    %v2212 = vunpack.c.l.b16 %v2176
    %v2213 = vunpack.c.l.b16 %v2177
    %v2214 = vunpack.c.l.b16 %v2178
    %v2215 = vunpack.c.l.b16 %v2179
    %v2216 = vunpack.c.l.b16 %v2180
    %v2217 = vunpack.c.l.b16 %v2181
    %v2218 = vunpack.c.l.b16 %v2182
    %v2219 = vunpack.c.l.b16 %v2183
    %v2220 = vunpack.c.l.b16 %v2184
    %v2221 = vunpack.c.l.b16 %v2185
    %v2222 = vpack.c.b16 %v2207, %v2206
    %v2223 = vpack.c.b16 %v2209, %v2208
    %v2224 = vpack.c.b16 %v2211, %v2210
    %v2225 = vpack.c.b16 %v2213, %v2212
    %v2226 = vpack.c.b16 %v2215, %v2214
    %v2227 = vpack.c.b16 %v2217, %v2216
    %v2228 = vpack.c.b16 %v2219, %v2218
    %v2229 = vpack.c.b16 %v2221, %v2220
    %2238 = vmatpush.bf16.msra.mxu0 %v2229
    %2239 = vmatpush.bf16.msra.mxu0 %v2228
    %2240 = vmatpush.bf16.msra.mxu0 %v2227
    %2241 = vmatpush.bf16.msra.mxu0 %v2226
    %2242 = vmatpush.bf16.msra.mxu0 %v2225
    %2243 = vmatpush.bf16.msra.mxu0 %v2224
    %2244 = vmatpush.bf16.msra.mxu0 %v2223
    %2245 = vmatpush.bf16.msra.mxu0 %v2222
    %2246 = vmatmul.bf16.gmra.mxu0 %v2169
    %v2247 = vpop.f32.mrf.mxu0
    %v2248 = vadd.f32 %v2188, %v2247
    %v2249 = vpop.f32.mrf.mxu0
    %2250 = vdwg.mxu0
    %2251 = vmax.xlane.f32.xlu0 %v2248
    %v2252 = vpop.xlane.xlu0 %2251
    %v2253 = vsub.f32 %v2248, %v2252
    %v2254 = vmul.f32 %v2253, 1.442695
    %v2255 = vpow.pop %v2254
    %2256 = vadd.xlane.f32.xlu0 %v2255
    %v2257 = vpop.xlane.xlu0 %2256
    %v2258 = vlog2.pop %v2257
    %v2259 = vmul.f32 %v2258, 0.6931472
    %v2260 = vsub.f32 %v2253, %v2259
    %2261 = vst [vmem:[#allocation11] sm:$0xff] %v2260
    // Predicated region
    $region50: #{tpu_custom_call.1} parent=1 // pred_check
      _
    $region51: #{tpu_custom_call.1} parent=1 // pred_check_branch
      %2263 = sbr.rel (0) target = $region53
    $region52: #{tpu_custom_call.1} parent=1 // pred_region
      %2265 = vsyncadd [#allocation4], 0
      %s2267 = sshll.u32 [#allocation11], 4
      %s2268 = int_to_ptr.vmem [resolvable:$true] %s2267
      %s2269 = sshll.u32 %s7, 4
      %s2270 = int_to_ptr.hbm [resolvable:$true] %s2269
      %2272 = dma.vmem_to_hbm [thread:$0]  %s2268, 128, %s2270, [#allocation4]
    $region53: #{tpu_custom_call.1} parent=1 // pred_fallthru
      _
    // Predicated region
    $region54: #{tpu_custom_call.1} parent=1 // pred_check
      _
    $region55: #{tpu_custom_call.1} parent=1 // pred_check_branch
      %2274 = sbr.rel (0) target = $region57
    $region56: #{tpu_custom_call.1} parent=1 // pred_region
      %2276 = dma.done [#allocation4], 128
    $region57: #{tpu_custom_call.1} parent=1 // pred_fallthru
      _
    %2277 = vsyncpa [#allocation3], 1
    %2278 = vsyncpa [#allocation6], 1
    %2279 = vsyncpa [#allocation9], 1
    %2280 = vsyncpa [#allocation4], 1

</llo_original>
